<compile_context>
chip_gen: v7x
topology: tpu7x:2x2x1
jax: 0.10.0
libtpu: 0.0.40
codegen_flags: <defaults>
</compile_context>

<pallas_src>
import functools

import numpy as np
import jax
import jax.numpy as jnp
from jax.experimental import pallas as pl
from jax.experimental.pallas import tpu as pltpu


_N_TYPES = 6  # x, y, x*x, y*y, x*y, |x-y|


# ------------------------- parameter construction -------------------------

def _gauss_1d(size: int, sigma: float) -> np.ndarray:
    coords = np.arange(size, dtype=np.float32) - size // 2
    g = np.exp(-(coords ** 2) / (2.0 * sigma ** 2))
    return (g / g.sum()).astype(np.float32)


def _conv_matrix(n: int, g: np.ndarray, pad: int) -> np.ndarray:
    """M[i, j] = g[j - i + pad]: zero-padded same-size 1-D cross-correlation."""
    idx = np.arange(n)
    k = idx[None, :] - idx[:, None] + pad
    valid = (k >= 0) & (k < g.shape[0])
    return np.where(valid, g[np.clip(k, 0, g.shape[0] - 1)], 0.0).astype(np.float32)


# ------------------------------ Pallas kernel ------------------------------

def _msssim_l1_kernel(x_ref, y_ref, ahs_ref, awt_ref, out_ref, u_ref, *,
                      c1, c2, a1, a2, n_sigma, h_pad, w, bt):
    w_slab = bt * w            # lanes per image type (Bt images wide)
    m = _N_TYPES * bt          # total (type, batch) images in the slab
    blk = bt * h_pad           # sublane rows per type after restacking

    x = x_ref[0]               # (h_pad, Bt*W), f32
    y = y_ref[0]

    # Build the 6-type slab directly in VMEM scratch (no concatenate copy).
    u_ref[:, 0 * w_slab:1 * w_slab] = x
    u_ref[:, 1 * w_slab:2 * w_slab] = y
    u_ref[:, 2 * w_slab:3 * w_slab] = x * x
    u_ref[:, 3 * w_slab:4 * w_slab] = y * y
    u_ref[:, 4 * w_slab:5 * w_slab] = x * y
    u_ref[:, 5 * w_slab:6 * w_slab] = jnp.abs(x - y)

    # Fused row pass for ALL sigmas: (n_sigma*h_pad, h_pad) @ (h_pad, 6*Bt*W).
    t = jnp.dot(ahs_ref[...], u_ref[...], preferred_element_type=jnp.float32)

    pi_cs = None
    l_m = None
    g_l1 = None
    for s in range(n_sigma):   # n_sigma == 5: tiny trip count, keep unrolled
        ts = t[s * h_pad:(s + 1) * h_pad, :]          # (h_pad, 6*Bt*W)

        # Lane -> sublane restack of the m per-image (h_pad, W) blocks, then
        # ONE tall column-pass matmul with the shared (W, W) Aw_s^T (no kron).
        v = jnp.concatenate([ts[:, j * w:(j + 1) * w] for j in range(m)], axis=0)
        c = jnp.dot(v, awt_ref[s], preferred_element_type=jnp.float32)  # (m*h_pad, W)

        mux = c[0 * blk:1 * blk, :]
        muy = c[1 * blk:2 * blk, :]
        ex2 = c[2 * blk:3 * blk, :]
        ey2 = c[3 * blk:4 * blk, :]
        exy = c[4 * blk:5 * blk, :]

        mux2 = mux * mux
        muy2 = muy * muy
        muxy = mux * muy
        sx2 = ex2 - mux2
        sy2 = ey2 - muy2
        sxy = exy - muxy

        # Exact reciprocal (EUP): approx error compounds through an ~18th power.
        l = (2.0 * muxy + c1) * pl.reciprocal(mux2 + muy2 + c1, approx=False)
        cs = (2.0 * sxy + c2) * pl.reciprocal(sx2 + sy2 + c2, approx=False)

        cs3 = cs * cs * cs                 # 3 identical channels per sigma
        pi_cs = cs3 if pi_cs is None else pi_cs * cs3
        if s == n_sigma - 1:
            l_m = l * l * l                # l[:,-1]*l[:,-2]*l[:,-3]
            g_l1 = c[5 * blk:6 * blk, :]   # conv_last(|x-y|), mean of 3 id. ch.

    # Per-step partial of  sum[ a1*(1 - lM*PIcs) + a2*gauss_l1 ].
    # Zero-padded batch/row entries have lM*PIcs == 1 and gauss_l1 == 0, so
    # they contribute (numerically) nothing to this partial.
    npix = float(blk * w)
    partial = a1 * (npix - jnp.sum(l_m * pi_cs)) + a2 * jnp.sum(g_l1)
    out_ref[...] = jnp.broadcast_to(partial, out_ref.shape).astype(jnp.float32)


# --------------------------------- wrapper ---------------------------------

def _pick_batch_tile(b: int, w: int) -> int:
    """Images per grid step: fill ~128 lanes, but keep >=2 steps for megacore."""
    bt = max(1, -(-128 // w))          # ceil(128 / W): lane-dense slab
    if b > 1:
        bt = min(bt, -(-b // 2))       # keep at least two parallel grid steps
    return max(1, min(bt, b))


def ms_ssim_l1_loss(x, y,
                    gaussian_sigmas=(0.5, 1.0, 2.0, 4.0, 8.0),
                    data_range=1.0, K=(0.01, 0.03),
                    alpha=0.025, compensation=200.0):
    b, ch, h, w = x.shape
    assert ch == 1, "groups=1 conv with (15,1,33,33) weights requires C == 1"
    assert y.shape == x.shape

    c1 = (K[0] * data_range) ** 2
    c2 = (K[1] * data_range) ** 2
    a1 = compensation * alpha                        # folded constants
    a2 = compensation * (1.0 - alpha) / data_range
    pad = int(2 * gaussian_sigmas[-1])
    filter_size = int(4 * gaussian_sigmas[-1] + 1)
    n_sigma = len(gaussian_sigmas)

    bt = _pick_batch_tile(b, w)
    nsteps = -(-b // bt)
    b_pad = nsteps * bt                              # zero-image batch padding
    h_pad = -(-h // 8) * 8                           # sublane alignment
    w_slab = bt * w
    m = _N_TYPES * bt
    blk = bt * h_pad

    # Weight banks (tiny now): stacked row-pass matrices for all sigmas, with
    # rows >= h zeroed so padded output rows contribute nothing; exact
    # transposed column-pass matrices, one (W, W) per sigma (shared by images).
    g1d = [_gauss_1d(filter_size, s) for s in gaussian_sigmas]
    ah_list = []
    for g in g1d:
        am = _conv_matrix(h_pad, g, pad)
        am[h:, :] = 0.0
        ah_list.append(am)
    ahs = jnp.asarray(np.concatenate(ah_list, axis=0), jnp.float32)   # (5*h_pad, h_pad)
    awt = jnp.asarray(np.stack([_conv_matrix(w, g, pad).T for g in g1d]),
                      jnp.float32)                                    # (5, W, W)

    # (B,1,H,W) -> (nsteps, h_pad, Bt*W) lane-stacked slabs (cheap XLA ops).
    def to_slab(a):
        a = a[:, 0].astype(jnp.float32)                               # (B, H, W)
        a = jnp.pad(a, ((0, b_pad - b), (0, h_pad - h), (0, 0)))
        a = a.reshape(nsteps, bt, h_pad, w).transpose(0, 2, 1, 3)
        return a.reshape(nsteps, h_pad, w_slab)

    xs = to_slab(x)
    ys = to_slab(y)

    kernel = functools.partial(
        _msssim_l1_kernel,
        c1=float(c1), c2=float(c2), a1=float(a1), a2=float(a2),
        n_sigma=n_sigma, h_pad=h_pad, w=w, bt=bt)

    flops = nsteps * (2 * (n_sigma * h_pad) * h_pad * (_N_TYPES * w_slab)   # row pass
                      + n_sigma * 2 * (m * h_pad) * w * w                   # column pass
                      + 40 * blk * w)                                        # elementwise
    transcendentals = nsteps * 2 * n_sigma * blk * w                         # reciprocals
    bytes_accessed = 4 * (xs.size + ys.size + ahs.size + awt.size + nsteps * 8 * 128)
    cost = pl.CostEstimate(flops=int(flops),
                           transcendentals=int(transcendentals),
                           bytes_accessed=int(bytes_accessed))

    partials = pl.pallas_call(
        kernel,
        out_shape=jax.ShapeDtypeStruct((nsteps, 8, 128), jnp.float32),
        grid_spec=pltpu.PrefetchScalarGridSpec(
            num_scalar_prefetch=0,
            grid=(nsteps,),
            in_specs=[
                pl.BlockSpec((1, h_pad, w_slab), lambda i: (i, 0, 0)),
                pl.BlockSpec((1, h_pad, w_slab), lambda i: (i, 0, 0)),
                pl.BlockSpec((n_sigma * h_pad, h_pad), lambda i: (0, 0)),
                pl.BlockSpec((n_sigma, w, w), lambda i: (0, 0, 0)),
            ],
            out_specs=pl.BlockSpec((1, 8, 128), lambda i: (i, 0, 0)),
            scratch_shapes=[pltpu.VMEM((h_pad, _N_TYPES * w_slab), jnp.float32)],
        ),
        compiler_params=pltpu.CompilerParams(
            dimension_semantics=("parallel",)),   # independent per-step partials
        cost_estimate=cost,
    )(xs, ys, ahs, awt)

    # Final reduction (sum per-step partials, mean over real B*H*W) in JAX.
    return jnp.sum(partials[:, 0, 0]) / (b * h * w)


# -------------------------- pure-JAX reference -----------------------------

def _reference(x, y, ah, aw, c1, c2, alpha, compensation, data_range):
    x3 = x[:, 0].astype(jnp.float32)
    y3 = y[:, 0].astype(jnp.float32)

    def conv(r, cm, img):   # exact same-size cross-correlation: r @ img @ cm^T
        return jnp.einsum('ij,bjn,mn->bim', r, img, cm)

    pi_cs = 1.0
    ns = ah.shape[0]
    for s in range(ns):
        mux = conv(ah[s], aw[s], x3)
        muy = conv(ah[s], aw[s], y3)
        mux2, muy2, muxy = mux * mux, muy * muy, mux * muy
        sx2 = conv(ah[s], aw[s], x3 * x3) - mux2
        sy2 = conv(ah[s], aw[s], y3 * y3) - muy2
        sxy = conv(ah[s], aw[s], x3 * y3) - muxy
        l = (2 * muxy + c1) / (mux2 + muy2 + c1)
        cs = (2 * sxy + c2) / (sx2 + sy2 + c2)
        pi_cs = pi_cs * cs ** 3
        if s == ns - 1:
            l_m = l ** 3
            g_l1 = conv(ah[s], aw[s], jnp.abs(x3 - y3))
    loss = alpha * (1 - l_m * pi_cs) + (1 - alpha) * g_l1 / data_range
    return jnp.mean(compensation * loss)


# ----------------------------------- main -----------------------------------

if __name__ == "__main__":
    B, C, H, W = 2, 1, 16, 16
    key = jax.random.PRNGKey(0)
    kx, ky = jax.random.split(key)
    x = jax.random.uniform(kx, (B, C, H, W), dtype=jnp.float32)
    y = jax.random.uniform(ky, (B, C, H, W), dtype=jnp.float32)

    loss = jax.block_until_ready(ms_ssim_l1_loss(x, y))

    # sanity check against a pure-JAX reference
    sigmas = (0.5, 1.0, 2.0, 4.0, 8.0)
    pad, fs = 16, 33
    ah = jnp.asarray(np.stack([_conv_matrix(H, _gauss_1d(fs, s), pad) for s in sigmas]))
    aw = jnp.asarray(np.stack([_conv_matrix(W, _gauss_1d(fs, s), pad) for s in sigmas]))
    ref = _reference(x, y, ah, aw, 0.01 ** 2, 0.03 ** 2, 0.025, 200.0, 1.0)
    np.testing.assert_allclose(np.asarray(loss), np.asarray(ref), rtol=5e-2, atol=5e-2)

    print("KERNEL_OK")
</pallas_src>

<mosaic_0001>
module attributes {stable_mosaic.version = 11 : i64} {
  func.func @_msssim_l1_kernel(%arg0: i32, %arg1: memref<1x16x16xf32, #tpu.memory_space<vmem>>, %arg2: memref<1x16x16xf32, #tpu.memory_space<vmem>>, %arg3: memref<80x16xf32, #tpu.memory_space<vmem>>, %arg4: memref<5x16x16xf32, #tpu.memory_space<vmem>>, %arg5: memref<1x8x128xf32, #tpu.memory_space<vmem>>, %arg6: memref<16x96xf32, #tpu.memory_space<vmem>>) attributes {dimension_semantics = [#tpu.dimension_semantics<parallel>], iteration_bounds = array<i64: 2>, scalar_prefetch = 0 : i64, scratch_operands = 1 : i64, tpu.core_type = #tpu.core_type<tc>, window_params = [{transform_indices = @transform_0, window_bounds = array<i64: 1, 16, 16>}, {transform_indices = @transform_1, window_bounds = array<i64: 1, 16, 16>}, {pipeline_mode = #tpu.pipeline_mode<synchronous>, transform_indices = @transform_2, window_bounds = array<i64: 80, 16>}, {pipeline_mode = #tpu.pipeline_mode<synchronous>, transform_indices = @transform_3, window_bounds = array<i64: 5, 16, 16>}, {transform_indices = @transform_4, window_bounds = array<i64: 1, 8, 128>}]} {
    %c0 = arith.constant 0 : index
    %c0_0 = arith.constant 0 : index
    %c0_1 = arith.constant 0 : index
    %0 = vector.load %arg1[%c0, %c0_0, %c0_1] : memref<1x16x16xf32, #tpu.memory_space<vmem>>, vector<1x16x16xf32>
    %1 = vector.shape_cast %0 : vector<1x16x16xf32> to vector<16x16xf32>
    %c0_2 = arith.constant 0 : index
    %c0_3 = arith.constant 0 : index
    %c0_4 = arith.constant 0 : index
    %2 = vector.load %arg2[%c0_2, %c0_3, %c0_4] : memref<1x16x16xf32, #tpu.memory_space<vmem>>, vector<1x16x16xf32>
    %3 = vector.shape_cast %2 : vector<1x16x16xf32> to vector<16x16xf32>
    %c0_5 = arith.constant 0 : index
    %c0_6 = arith.constant 0 : index
    %4 = vector.load %arg6[%c0_5, %c0_6] : memref<16x96xf32, #tpu.memory_space<vmem>>, vector<16x16xf32>
    tpu.vector_store %arg6[%c0_5, %c0_6], %1 {strides = array<i32>} : memref<16x96xf32, #tpu.memory_space<vmem>>, vector<16x16xf32>,
    %c0_7 = arith.constant 0 : index
    %c16 = arith.constant 16 : index
    %5 = vector.load %arg6[%c0_7, %c16] : memref<16x96xf32, #tpu.memory_space<vmem>>, vector<16x16xf32>
    tpu.vector_store %arg6[%c0_7, %c16], %3 {strides = array<i32>} : memref<16x96xf32, #tpu.memory_space<vmem>>, vector<16x16xf32>,
    %6 = arith.mulf %1, %1 : vector<16x16xf32>
    %c0_8 = arith.constant 0 : index
    %c32 = arith.constant 32 : index
    %7 = vector.load %arg6[%c0_8, %c32] : memref<16x96xf32, #tpu.memory_space<vmem>>, vector<16x16xf32>
    tpu.vector_store %arg6[%c0_8, %c32], %6 {strides = array<i32>} : memref<16x96xf32, #tpu.memory_space<vmem>>, vector<16x16xf32>,
    %8 = arith.mulf %3, %3 : vector<16x16xf32>
    %c0_9 = arith.constant 0 : index
    %c48 = arith.constant 48 : index
    %9 = vector.load %arg6[%c0_9, %c48] : memref<16x96xf32, #tpu.memory_space<vmem>>, vector<16x16xf32>
    tpu.vector_store %arg6[%c0_9, %c48], %8 {strides = array<i32>} : memref<16x96xf32, #tpu.memory_space<vmem>>, vector<16x16xf32>,
    %10 = arith.mulf %1, %3 : vector<16x16xf32>
    %c0_10 = arith.constant 0 : index
    %c64 = arith.constant 64 : index
    %11 = vector.load %arg6[%c0_10, %c64] : memref<16x96xf32, #tpu.memory_space<vmem>>, vector<16x16xf32>
    tpu.vector_store %arg6[%c0_10, %c64], %10 {strides = array<i32>} : memref<16x96xf32, #tpu.memory_space<vmem>>, vector<16x16xf32>,
    %12 = arith.subf %1, %3 : vector<16x16xf32>
    %13 = math.absf %12 : vector<16x16xf32>
    %c0_11 = arith.constant 0 : index
    %c80 = arith.constant 80 : index
    %14 = vector.load %arg6[%c0_11, %c80] : memref<16x96xf32, #tpu.memory_space<vmem>>, vector<16x16xf32>
    tpu.vector_store %arg6[%c0_11, %c80], %13 {strides = array<i32>} : memref<16x96xf32, #tpu.memory_space<vmem>>, vector<16x16xf32>,
    %c0_12 = arith.constant 0 : index
    %c0_13 = arith.constant 0 : index
    %15 = vector.load %arg3[%c0_12, %c0_13] : memref<80x16xf32, #tpu.memory_space<vmem>>, vector<80x16xf32>
    %c0_14 = arith.constant 0 : index
    %c0_15 = arith.constant 0 : index
    %16 = vector.load %arg6[%c0_14, %c0_15] : memref<16x96xf32, #tpu.memory_space<vmem>>, vector<16x96xf32>
    %cst = arith.constant dense<0.000000e+00> : vector<80x96xf32>
    %17 = tpu.matmul %15, %16, %cst {dimension_numbers = #tpu.dot_dimension_numbers<[1], [0], [0], [1], [0, 0, 1, 1], [], []>} : vector<80x16xf32>, vector<16x96xf32>, vector<80x96xf32> -> vector<80x96xf32>
    %18 = vector.extract_strided_slice %17 {offsets = [0, 0], sizes = [16, 96], strides = [1, 1]} : vector<80x96xf32> to vector<16x96xf32>
    %19 = vector.extract_strided_slice %18 {offsets = [0, 0], sizes = [16, 16], strides = [1, 1]} : vector<16x96xf32> to vector<16x16xf32>
    %20 = vector.extract_strided_slice %18 {offsets = [0, 16], sizes = [16, 16], strides = [1, 1]} : vector<16x96xf32> to vector<16x16xf32>
    %21 = vector.extract_strided_slice %18 {offsets = [0, 32], sizes = [16, 16], strides = [1, 1]} : vector<16x96xf32> to vector<16x16xf32>
    %22 = vector.extract_strided_slice %18 {offsets = [0, 48], sizes = [16, 16], strides = [1, 1]} : vector<16x96xf32> to vector<16x16xf32>
    %23 = vector.extract_strided_slice %18 {offsets = [0, 64], sizes = [16, 16], strides = [1, 1]} : vector<16x96xf32> to vector<16x16xf32>
    %24 = vector.extract_strided_slice %18 {offsets = [0, 80], sizes = [16, 16], strides = [1, 1]} : vector<16x96xf32> to vector<16x16xf32>
    %25 = tpu.concatenate %19, %20, %21, %22, %23, %24 in 0 : vector<16x16xf32>, vector<16x16xf32>, vector<16x16xf32>, vector<16x16xf32>, vector<16x16xf32>, vector<16x16xf32> -> vector<96x16xf32>
    %c0_16 = arith.constant 0 : index
    %c0_17 = arith.constant 0 : index
    %c0_18 = arith.constant 0 : index
    %26 = vector.load %arg4[%c0_16, %c0_17, %c0_18] : memref<5x16x16xf32, #tpu.memory_space<vmem>>, vector<1x16x16xf32>
    %27 = vector.shape_cast %26 : vector<1x16x16xf32> to vector<16x16xf32>
    %cst_19 = arith.constant dense<0.000000e+00> : vector<96x16xf32>
    %28 = tpu.matmul %25, %27, %cst_19 {dimension_numbers = #tpu.dot_dimension_numbers<[1], [0], [0], [1], [0, 0, 1, 1], [], []>} : vector<96x16xf32>, vector<16x16xf32>, vector<96x16xf32> -> vector<96x16xf32>
    %29 = vector.extract_strided_slice %28 {offsets = [0, 0], sizes = [16, 16], strides = [1, 1]} : vector<96x16xf32> to vector<16x16xf32>
    %30 = vector.extract_strided_slice %28 {offsets = [16, 0], sizes = [16, 16], strides = [1, 1]} : vector<96x16xf32> to vector<16x16xf32>
    %31 = vector.extract_strided_slice %28 {offsets = [32, 0], sizes = [16, 16], strides = [1, 1]} : vector<96x16xf32> to vector<16x16xf32>
    %32 = vector.extract_strided_slice %28 {offsets = [48, 0], sizes = [16, 16], strides = [1, 1]} : vector<96x16xf32> to vector<16x16xf32>
    %33 = vector.extract_strided_slice %28 {offsets = [64, 0], sizes = [16, 16], strides = [1, 1]} : vector<96x16xf32> to vector<16x16xf32>
    %34 = arith.mulf %29, %29 : vector<16x16xf32>
    %35 = arith.mulf %30, %30 : vector<16x16xf32>
    %36 = arith.mulf %29, %30 : vector<16x16xf32>
    %37 = arith.subf %31, %34 : vector<16x16xf32>
    %38 = arith.subf %32, %35 : vector<16x16xf32>
    %39 = arith.subf %33, %36 : vector<16x16xf32>
    %cst_20 = arith.constant 2.000000e+00 : f32
    %40 = vector.broadcast %cst_20 : f32 to vector<16x16xf32>
    %41 = arith.mulf %40, %39 : vector<16x16xf32>
    %cst_21 = arith.constant 8.99999984E-4 : f32
    %42 = vector.broadcast %cst_21 : f32 to vector<16x16xf32>
    %43 = arith.addf %41, %42 : vector<16x16xf32>
    %44 = arith.addf %37, %38 : vector<16x16xf32>
    %cst_22 = arith.constant 8.99999984E-4 : f32
    %45 = vector.broadcast %cst_22 : f32 to vector<16x16xf32>
    %46 = arith.addf %44, %45 : vector<16x16xf32>
    %47 = tpu.reciprocal %46 : vector<16x16xf32> -> vector<16x16xf32>
    %48 = arith.mulf %43, %47 : vector<16x16xf32>
    %49 = arith.mulf %48, %48 : vector<16x16xf32>
    %50 = arith.mulf %49, %48 : vector<16x16xf32>
    %51 = vector.extract_strided_slice %17 {offsets = [16, 0], sizes = [16, 96], strides = [1, 1]} : vector<80x96xf32> to vector<16x96xf32>
    %52 = vector.extract_strided_slice %51 {offsets = [0, 0], sizes = [16, 16], strides = [1, 1]} : vector<16x96xf32> to vector<16x16xf32>
    %53 = vector.extract_strided_slice %51 {offsets = [0, 16], sizes = [16, 16], strides = [1, 1]} : vector<16x96xf32> to vector<16x16xf32>
    %54 = vector.extract_strided_slice %51 {offsets = [0, 32], sizes = [16, 16], strides = [1, 1]} : vector<16x96xf32> to vector<16x16xf32>
    %55 = vector.extract_strided_slice %51 {offsets = [0, 48], sizes = [16, 16], strides = [1, 1]} : vector<16x96xf32> to vector<16x16xf32>
    %56 = vector.extract_strided_slice %51 {offsets = [0, 64], sizes = [16, 16], strides = [1, 1]} : vector<16x96xf32> to vector<16x16xf32>
    %57 = vector.extract_strided_slice %51 {offsets = [0, 80], sizes = [16, 16], strides = [1, 1]} : vector<16x96xf32> to vector<16x16xf32>
    %58 = tpu.concatenate %52, %53, %54, %55, %56, %57 in 0 : vector<16x16xf32>, vector<16x16xf32>, vector<16x16xf32>, vector<16x16xf32>, vector<16x16xf32>, vector<16x16xf32> -> vector<96x16xf32>
    %c1 = arith.constant 1 : index
    %c0_23 = arith.constant 0 : index
    %c0_24 = arith.constant 0 : index
    %59 = vector.load %arg4[%c1, %c0_23, %c0_24] : memref<5x16x16xf32, #tpu.memory_space<vmem>>, vector<1x16x16xf32>
    %60 = vector.shape_cast %59 : vector<1x16x16xf32> to vector<16x16xf32>
    %cst_25 = arith.constant dense<0.000000e+00> : vector<96x16xf32>
    %61 = tpu.matmul %58, %60, %cst_25 {dimension_numbers = #tpu.dot_dimension_numbers<[1], [0], [0], [1], [0, 0, 1, 1], [], []>} : vector<96x16xf32>, vector<16x16xf32>, vector<96x16xf32> -> vector<96x16xf32>
    %62 = vector.extract_strided_slice %61 {offsets = [0, 0], sizes = [16, 16], strides = [1, 1]} : vector<96x16xf32> to vector<16x16xf32>
    %63 = vector.extract_strided_slice %61 {offsets = [16, 0], sizes = [16, 16], strides = [1, 1]} : vector<96x16xf32> to vector<16x16xf32>
    %64 = vector.extract_strided_slice %61 {offsets = [32, 0], sizes = [16, 16], strides = [1, 1]} : vector<96x16xf32> to vector<16x16xf32>
    %65 = vector.extract_strided_slice %61 {offsets = [48, 0], sizes = [16, 16], strides = [1, 1]} : vector<96x16xf32> to vector<16x16xf32>
    %66 = vector.extract_strided_slice %61 {offsets = [64, 0], sizes = [16, 16], strides = [1, 1]} : vector<96x16xf32> to vector<16x16xf32>
    %67 = arith.mulf %62, %62 : vector<16x16xf32>
    %68 = arith.mulf %63, %63 : vector<16x16xf32>
    %69 = arith.mulf %62, %63 : vector<16x16xf32>
    %70 = arith.subf %64, %67 : vector<16x16xf32>
    %71 = arith.subf %65, %68 : vector<16x16xf32>
    %72 = arith.subf %66, %69 : vector<16x16xf32>
    %cst_26 = arith.constant 2.000000e+00 : f32
    %73 = vector.broadcast %cst_26 : f32 to vector<16x16xf32>
    %74 = arith.mulf %73, %72 : vector<16x16xf32>
    %cst_27 = arith.constant 8.99999984E-4 : f32
    %75 = vector.broadcast %cst_27 : f32 to vector<16x16xf32>
    %76 = arith.addf %74, %75 : vector<16x16xf32>
    %77 = arith.addf %70, %71 : vector<16x16xf32>
    %cst_28 = arith.constant 8.99999984E-4 : f32
    %78 = vector.broadcast %cst_28 : f32 to vector<16x16xf32>
    %79 = arith.addf %77, %78 : vector<16x16xf32>
    %80 = tpu.reciprocal %79 : vector<16x16xf32> -> vector<16x16xf32>
    %81 = arith.mulf %76, %80 : vector<16x16xf32>
    %82 = arith.mulf %81, %81 : vector<16x16xf32>
    %83 = arith.mulf %82, %81 : vector<16x16xf32>
    %84 = arith.mulf %50, %83 : vector<16x16xf32>
    %85 = vector.extract_strided_slice %17 {offsets = [32, 0], sizes = [16, 96], strides = [1, 1]} : vector<80x96xf32> to vector<16x96xf32>
    %86 = vector.extract_strided_slice %85 {offsets = [0, 0], sizes = [16, 16], strides = [1, 1]} : vector<16x96xf32> to vector<16x16xf32>
    %87 = vector.extract_strided_slice %85 {offsets = [0, 16], sizes = [16, 16], strides = [1, 1]} : vector<16x96xf32> to vector<16x16xf32>
    %88 = vector.extract_strided_slice %85 {offsets = [0, 32], sizes = [16, 16], strides = [1, 1]} : vector<16x96xf32> to vector<16x16xf32>
    %89 = vector.extract_strided_slice %85 {offsets = [0, 48], sizes = [16, 16], strides = [1, 1]} : vector<16x96xf32> to vector<16x16xf32>
    %90 = vector.extract_strided_slice %85 {offsets = [0, 64], sizes = [16, 16], strides = [1, 1]} : vector<16x96xf32> to vector<16x16xf32>
    %91 = vector.extract_strided_slice %85 {offsets = [0, 80], sizes = [16, 16], strides = [1, 1]} : vector<16x96xf32> to vector<16x16xf32>
    %92 = tpu.concatenate %86, %87, %88, %89, %90, %91 in 0 : vector<16x16xf32>, vector<16x16xf32>, vector<16x16xf32>, vector<16x16xf32>, vector<16x16xf32>, vector<16x16xf32> -> vector<96x16xf32>
    %c2 = arith.constant 2 : index
    %c0_29 = arith.constant 0 : index
    %c0_30 = arith.constant 0 : index
    %93 = vector.load %arg4[%c2, %c0_29, %c0_30] : memref<5x16x16xf32, #tpu.memory_space<vmem>>, vector<1x16x16xf32>
    %94 = vector.shape_cast %93 : vector<1x16x16xf32> to vector<16x16xf32>
    %cst_31 = arith.constant dense<0.000000e+00> : vector<96x16xf32>
    %95 = tpu.matmul %92, %94, %cst_31 {dimension_numbers = #tpu.dot_dimension_numbers<[1], [0], [0], [1], [0, 0, 1, 1], [], []>} : vector<96x16xf32>, vector<16x16xf32>, vector<96x16xf32> -> vector<96x16xf32>
    %96 = vector.extract_strided_slice %95 {offsets = [0, 0], sizes = [16, 16], strides = [1, 1]} : vector<96x16xf32> to vector<16x16xf32>
    %97 = vector.extract_strided_slice %95 {offsets = [16, 0], sizes = [16, 16], strides = [1, 1]} : vector<96x16xf32> to vector<16x16xf32>
    %98 = vector.extract_strided_slice %95 {offsets = [32, 0], sizes = [16, 16], strides = [1, 1]} : vector<96x16xf32> to vector<16x16xf32>
    %99 = vector.extract_strided_slice %95 {offsets = [48, 0], sizes = [16, 16], strides = [1, 1]} : vector<96x16xf32> to vector<16x16xf32>
    %100 = vector.extract_strided_slice %95 {offsets = [64, 0], sizes = [16, 16], strides = [1, 1]} : vector<96x16xf32> to vector<16x16xf32>
    %101 = arith.mulf %96, %96 : vector<16x16xf32>
    %102 = arith.mulf %97, %97 : vector<16x16xf32>
    %103 = arith.mulf %96, %97 : vector<16x16xf32>
    %104 = arith.subf %98, %101 : vector<16x16xf32>
    %105 = arith.subf %99, %102 : vector<16x16xf32>
    %106 = arith.subf %100, %103 : vector<16x16xf32>
    %cst_32 = arith.constant 2.000000e+00 : f32
    %107 = vector.broadcast %cst_32 : f32 to vector<16x16xf32>
    %108 = arith.mulf %107, %106 : vector<16x16xf32>
    %cst_33 = arith.constant 8.99999984E-4 : f32
    %109 = vector.broadcast %cst_33 : f32 to vector<16x16xf32>
    %110 = arith.addf %108, %109 : vector<16x16xf32>
    %111 = arith.addf %104, %105 : vector<16x16xf32>
    %cst_34 = arith.constant 8.99999984E-4 : f32
    %112 = vector.broadcast %cst_34 : f32 to vector<16x16xf32>
    %113 = arith.addf %111, %112 : vector<16x16xf32>
    %114 = tpu.reciprocal %113 : vector<16x16xf32> -> vector<16x16xf32>
    %115 = arith.mulf %110, %114 : vector<16x16xf32>
    %116 = arith.mulf %115, %115 : vector<16x16xf32>
    %117 = arith.mulf %116, %115 : vector<16x16xf32>
    %118 = arith.mulf %84, %117 : vector<16x16xf32>
    %119 = vector.extract_strided_slice %17 {offsets = [48, 0], sizes = [16, 96], strides = [1, 1]} : vector<80x96xf32> to vector<16x96xf32>
    %120 = vector.extract_strided_slice %119 {offsets = [0, 0], sizes = [16, 16], strides = [1, 1]} : vector<16x96xf32> to vector<16x16xf32>
    %121 = vector.extract_strided_slice %119 {offsets = [0, 16], sizes = [16, 16], strides = [1, 1]} : vector<16x96xf32> to vector<16x16xf32>
    %122 = vector.extract_strided_slice %119 {offsets = [0, 32], sizes = [16, 16], strides = [1, 1]} : vector<16x96xf32> to vector<16x16xf32>
    %123 = vector.extract_strided_slice %119 {offsets = [0, 48], sizes = [16, 16], strides = [1, 1]} : vector<16x96xf32> to vector<16x16xf32>
    %124 = vector.extract_strided_slice %119 {offsets = [0, 64], sizes = [16, 16], strides = [1, 1]} : vector<16x96xf32> to vector<16x16xf32>
    %125 = vector.extract_strided_slice %119 {offsets = [0, 80], sizes = [16, 16], strides = [1, 1]} : vector<16x96xf32> to vector<16x16xf32>
    %126 = tpu.concatenate %120, %121, %122, %123, %124, %125 in 0 : vector<16x16xf32>, vector<16x16xf32>, vector<16x16xf32>, vector<16x16xf32>, vector<16x16xf32>, vector<16x16xf32> -> vector<96x16xf32>
    %c3 = arith.constant 3 : index
    %c0_35 = arith.constant 0 : index
    %c0_36 = arith.constant 0 : index
    %127 = vector.load %arg4[%c3, %c0_35, %c0_36] : memref<5x16x16xf32, #tpu.memory_space<vmem>>, vector<1x16x16xf32>
    %128 = vector.shape_cast %127 : vector<1x16x16xf32> to vector<16x16xf32>
    %cst_37 = arith.constant dense<0.000000e+00> : vector<96x16xf32>
    %129 = tpu.matmul %126, %128, %cst_37 {dimension_numbers = #tpu.dot_dimension_numbers<[1], [0], [0], [1], [0, 0, 1, 1], [], []>} : vector<96x16xf32>, vector<16x16xf32>, vector<96x16xf32> -> vector<96x16xf32>
    %130 = vector.extract_strided_slice %129 {offsets = [0, 0], sizes = [16, 16], strides = [1, 1]} : vector<96x16xf32> to vector<16x16xf32>
    %131 = vector.extract_strided_slice %129 {offsets = [16, 0], sizes = [16, 16], strides = [1, 1]} : vector<96x16xf32> to vector<16x16xf32>
    %132 = vector.extract_strided_slice %129 {offsets = [32, 0], sizes = [16, 16], strides = [1, 1]} : vector<96x16xf32> to vector<16x16xf32>
    %133 = vector.extract_strided_slice %129 {offsets = [48, 0], sizes = [16, 16], strides = [1, 1]} : vector<96x16xf32> to vector<16x16xf32>
    %134 = vector.extract_strided_slice %129 {offsets = [64, 0], sizes = [16, 16], strides = [1, 1]} : vector<96x16xf32> to vector<16x16xf32>
    %135 = arith.mulf %130, %130 : vector<16x16xf32>
    %136 = arith.mulf %131, %131 : vector<16x16xf32>
    %137 = arith.mulf %130, %131 : vector<16x16xf32>
    %138 = arith.subf %132, %135 : vector<16x16xf32>
    %139 = arith.subf %133, %136 : vector<16x16xf32>
    %140 = arith.subf %134, %137 : vector<16x16xf32>
    %cst_38 = arith.constant 2.000000e+00 : f32
    %141 = vector.broadcast %cst_38 : f32 to vector<16x16xf32>
    %142 = arith.mulf %141, %140 : vector<16x16xf32>
    %cst_39 = arith.constant 8.99999984E-4 : f32
    %143 = vector.broadcast %cst_39 : f32 to vector<16x16xf32>
    %144 = arith.addf %142, %143 : vector<16x16xf32>
    %145 = arith.addf %138, %139 : vector<16x16xf32>
    %cst_40 = arith.constant 8.99999984E-4 : f32
    %146 = vector.broadcast %cst_40 : f32 to vector<16x16xf32>
    %147 = arith.addf %145, %146 : vector<16x16xf32>
    %148 = tpu.reciprocal %147 : vector<16x16xf32> -> vector<16x16xf32>
    %149 = arith.mulf %144, %148 : vector<16x16xf32>
    %150 = arith.mulf %149, %149 : vector<16x16xf32>
    %151 = arith.mulf %150, %149 : vector<16x16xf32>
    %152 = arith.mulf %118, %151 : vector<16x16xf32>
    %153 = vector.extract_strided_slice %17 {offsets = [64, 0], sizes = [16, 96], strides = [1, 1]} : vector<80x96xf32> to vector<16x96xf32>
    %154 = vector.extract_strided_slice %153 {offsets = [0, 0], sizes = [16, 16], strides = [1, 1]} : vector<16x96xf32> to vector<16x16xf32>
    %155 = vector.extract_strided_slice %153 {offsets = [0, 16], sizes = [16, 16], strides = [1, 1]} : vector<16x96xf32> to vector<16x16xf32>
    %156 = vector.extract_strided_slice %153 {offsets = [0, 32], sizes = [16, 16], strides = [1, 1]} : vector<16x96xf32> to vector<16x16xf32>
    %157 = vector.extract_strided_slice %153 {offsets = [0, 48], sizes = [16, 16], strides = [1, 1]} : vector<16x96xf32> to vector<16x16xf32>
    %158 = vector.extract_strided_slice %153 {offsets = [0, 64], sizes = [16, 16], strides = [1, 1]} : vector<16x96xf32> to vector<16x16xf32>
    %159 = vector.extract_strided_slice %153 {offsets = [0, 80], sizes = [16, 16], strides = [1, 1]} : vector<16x96xf32> to vector<16x16xf32>
    %160 = tpu.concatenate %154, %155, %156, %157, %158, %159 in 0 : vector<16x16xf32>, vector<16x16xf32>, vector<16x16xf32>, vector<16x16xf32>, vector<16x16xf32>, vector<16x16xf32> -> vector<96x16xf32>
    %c4 = arith.constant 4 : index
    %c0_41 = arith.constant 0 : index
    %c0_42 = arith.constant 0 : index
    %161 = vector.load %arg4[%c4, %c0_41, %c0_42] : memref<5x16x16xf32, #tpu.memory_space<vmem>>, vector<1x16x16xf32>
    %162 = vector.shape_cast %161 : vector<1x16x16xf32> to vector<16x16xf32>
    %cst_43 = arith.constant dense<0.000000e+00> : vector<96x16xf32>
    %163 = tpu.matmul %160, %162, %cst_43 {dimension_numbers = #tpu.dot_dimension_numbers<[1], [0], [0], [1], [0, 0, 1, 1], [], []>} : vector<96x16xf32>, vector<16x16xf32>, vector<96x16xf32> -> vector<96x16xf32>
    %164 = vector.extract_strided_slice %163 {offsets = [0, 0], sizes = [16, 16], strides = [1, 1]} : vector<96x16xf32> to vector<16x16xf32>
    %165 = vector.extract_strided_slice %163 {offsets = [16, 0], sizes = [16, 16], strides = [1, 1]} : vector<96x16xf32> to vector<16x16xf32>
    %166 = vector.extract_strided_slice %163 {offsets = [32, 0], sizes = [16, 16], strides = [1, 1]} : vector<96x16xf32> to vector<16x16xf32>
    %167 = vector.extract_strided_slice %163 {offsets = [48, 0], sizes = [16, 16], strides = [1, 1]} : vector<96x16xf32> to vector<16x16xf32>
    %168 = vector.extract_strided_slice %163 {offsets = [64, 0], sizes = [16, 16], strides = [1, 1]} : vector<96x16xf32> to vector<16x16xf32>
    %169 = arith.mulf %164, %164 : vector<16x16xf32>
    %170 = arith.mulf %165, %165 : vector<16x16xf32>
    %171 = arith.mulf %164, %165 : vector<16x16xf32>
    %172 = arith.subf %166, %169 : vector<16x16xf32>
    %173 = arith.subf %167, %170 : vector<16x16xf32>
    %174 = arith.subf %168, %171 : vector<16x16xf32>
    %cst_44 = arith.constant 2.000000e+00 : f32
    %175 = vector.broadcast %cst_44 : f32 to vector<16x16xf32>
    %176 = arith.mulf %175, %171 : vector<16x16xf32>
    %cst_45 = arith.constant 9.99999974E-5 : f32
    %177 = vector.broadcast %cst_45 : f32 to vector<16x16xf32>
    %178 = arith.addf %176, %177 : vector<16x16xf32>
    %179 = arith.addf %169, %170 : vector<16x16xf32>
    %cst_46 = arith.constant 9.99999974E-5 : f32
    %180 = vector.broadcast %cst_46 : f32 to vector<16x16xf32>
    %181 = arith.addf %179, %180 : vector<16x16xf32>
    %182 = tpu.reciprocal %181 : vector<16x16xf32> -> vector<16x16xf32>
    %183 = arith.mulf %178, %182 : vector<16x16xf32>
    %cst_47 = arith.constant 2.000000e+00 : f32
    %184 = vector.broadcast %cst_47 : f32 to vector<16x16xf32>
    %185 = arith.mulf %184, %174 : vector<16x16xf32>
    %cst_48 = arith.constant 8.99999984E-4 : f32
    %186 = vector.broadcast %cst_48 : f32 to vector<16x16xf32>
    %187 = arith.addf %185, %186 : vector<16x16xf32>
    %188 = arith.addf %172, %173 : vector<16x16xf32>
    %cst_49 = arith.constant 8.99999984E-4 : f32
    %189 = vector.broadcast %cst_49 : f32 to vector<16x16xf32>
    %190 = arith.addf %188, %189 : vector<16x16xf32>
    %191 = tpu.reciprocal %190 : vector<16x16xf32> -> vector<16x16xf32>
    %192 = arith.mulf %187, %191 : vector<16x16xf32>
    %193 = arith.mulf %192, %192 : vector<16x16xf32>
    %194 = arith.mulf %193, %192 : vector<16x16xf32>
    %195 = arith.mulf %152, %194 : vector<16x16xf32>
    %196 = arith.mulf %183, %183 : vector<16x16xf32>
    %197 = arith.mulf %196, %183 : vector<16x16xf32>
    %198 = vector.extract_strided_slice %163 {offsets = [80, 0], sizes = [16, 16], strides = [1, 1]} : vector<96x16xf32> to vector<16x16xf32>
    %199 = arith.mulf %197, %195 : vector<16x16xf32>
    %200 = vector.shape_cast %199 : vector<16x16xf32> to vector<1x16x16xf32>
    %cst_50 = arith.constant dense<0.000000e+00> : vector<1xf32>
    %201 = vector.multi_reduction <add>, %200, %cst_50 [1, 2] : vector<1x16x16xf32> to vector<1xf32>
    %202 = vector.shape_cast %201 : vector<1xf32> to vector<1x1x1xf32>
    %203 = vector.extract %202[0, 0, 0] : f32 from vector<1x1x1xf32>
    %cst_51 = arith.constant 2.560000e+02 : f32
    %204 = arith.subf %cst_51, %203 : f32
    %cst_52 = arith.constant 5.000000e+00 : f32
    %205 = arith.mulf %cst_52, %204 : f32
    %206 = vector.shape_cast %198 : vector<16x16xf32> to vector<1x16x16xf32>
    %cst_53 = arith.constant dense<0.000000e+00> : vector<1xf32>
    %207 = vector.multi_reduction <add>, %206, %cst_53 [1, 2] : vector<1x16x16xf32> to vector<1xf32>
    %208 = vector.shape_cast %207 : vector<1xf32> to vector<1x1x1xf32>
    %209 = vector.extract %208[0, 0, 0] : f32 from vector<1x1x1xf32>
    %cst_54 = arith.constant 1.950000e+02 : f32
    %210 = arith.mulf %cst_54, %209 : f32
    %211 = arith.addf %205, %210 : f32
    %212 = vector.broadcast %211 : f32 to vector<1x8x128xf32>
    %c0_55 = arith.constant 0 : index
    %c0_56 = arith.constant 0 : index
    %c0_57 = arith.constant 0 : index
    %213 = vector.load %arg5[%c0_55, %c0_56, %c0_57] : memref<1x8x128xf32, #tpu.memory_space<vmem>>, vector<1x8x128xf32>
    tpu.vector_store %arg5[%c0_55, %c0_56, %c0_57], %212 {strides = array<i32>} : memref<1x8x128xf32, #tpu.memory_space<vmem>>, vector<1x8x128xf32>,
    return
  }
  func.func @transform_0(%arg0: i32) -> (i32, i32, i32) {
    %c0_i32 = arith.constant 0 : i32
    %c0_i32_0 = arith.constant 0 : i32
    %c0_i32_1 = arith.constant 0 : i32
    return %arg0, %c0_i32, %c0_i32_0 : i32, i32, i32
  }
  func.func @transform_1(%arg0: i32) -> (i32, i32, i32) {
    %c0_i32 = arith.constant 0 : i32
    %c0_i32_0 = arith.constant 0 : i32
    %c0_i32_1 = arith.constant 0 : i32
    return %arg0, %c0_i32, %c0_i32_0 : i32, i32, i32
  }
  func.func @transform_2(%arg0: i32) -> (i32, i32) {
    %c0_i32 = arith.constant 0 : i32
    %c0_i32_0 = arith.constant 0 : i32
    %c0_i32_1 = arith.constant 0 : i32
    return %c0_i32, %c0_i32_0 : i32, i32
  }
  func.func @transform_3(%arg0: i32) -> (i32, i32, i32) {
    %c0_i32 = arith.constant 0 : i32
    %c0_i32_0 = arith.constant 0 : i32
    %c0_i32_1 = arith.constant 0 : i32
    %c0_i32_2 = arith.constant 0 : i32
    return %c0_i32, %c0_i32_0, %c0_i32_1 : i32, i32, i32
  }
  func.func @transform_4(%arg0: i32) -> (i32, i32, i32) {
    %c0_i32 = arith.constant 0 : i32
    %c0_i32_0 = arith.constant 0 : i32
    %c0_i32_1 = arith.constant 0 : i32
    return %arg0, %c0_i32, %c0_i32_0 : i32, i32, i32
  }
}

</mosaic_0001>

<llo_original>
// kernel: tpu_custom_call.1
$region0: #{tpu_custom_call.1}
  #allocation0 [shape = 'u32[]', space=smem, size = 0x4, offset = 0x4, fixed_abs, tag = 'smem constant byte address 0x4 - core index']
  #allocation1 [shape = 'u32[144,128]{1,0:T(1,128)}', space=vmem, size = 0x12000, scoped, tag = 'internal scratch']
  #allocation2 [shape = 'f32[16,96]{1,0:T(8,128)}', space=vmem, size = 0x2000, scoped, tag = 'scratch operand']
  %s0 = inlined_call_operand.hbm [shape: f32[2,16,16], index: 0, kind: input, shape index: {}]
  %s1 = inlined_call_operand.hbm [shape: f32[2,16,16], index: 1, kind: input, shape index: {}]
  %s2 = inlined_call_operand.vmem [shape: f32[80,16], index: 2, kind: input, shape index: {}]
  %s3 = inlined_call_operand.vmem [shape: f32[5,16,16], index: 3, kind: input, shape index: {}]
  %s4 = inlined_call_operand.hbm [shape: f32[2,8,128], index: 4, kind: output, shape index: {}]
  %s5 = sld [smem:[#allocation0]]
  $region57: #{tpu_custom_call.1} parent=0
    _
  %s7 = ssub.s32 1, %s5
  %s8 = scalar_select 0, %s7, %s5
  $region1: #{tpu_custom_call.1} parent=0
    #allocation3 [shape = 'u8[16384]{0}', space=vmem, size = 0x4000, scoped, tag = 'input window, operand 0']
    #allocation4 [shape = 's32[2]{0}', space=sflag, size = 0x8, scoped, tag = 'scoped memory for tpu_custom_call.1']
    #allocation5 [shape = 's32[2]{0}', space=sflag, size = 0x8, scoped, tag = 'scoped memory for tpu_custom_call.1']
    #allocation6 [shape = 'u8[16384]{0}', space=vmem, size = 0x4000, scoped, tag = 'input window, operand 1']
    #allocation7 [shape = 's32[2]{0}', space=sflag, size = 0x8, scoped, tag = 'scoped memory for tpu_custom_call.1']
    #allocation8 [shape = 'u8[8192]{0}', space=vmem, size = 0x2000, scoped, tag = 'output window, operand 0']
    %9 = vsyncpa [#allocation4], 0
    %s10 = scalar_lea.sflag [#allocation4], 1
    %11 = vsyncpa %s10, 0
    %12 = vsyncpa [#allocation7], 0
    %s13 = scalar_lea.sflag [#allocation7], 1
    %14 = vsyncpa %s13, 0
    %15 = vsyncpa [#allocation5], 0
    %s16 = scalar_lea.sflag [#allocation5], 1
    %17 = vsyncpa %s16, 0
    loop: start=0, step=1, limit=4
    $region2: #{tpu_custom_call.1} parent=1 // loop_pre_header
      _
    $region3: #{tpu_custom_call.1} parent=1 // loop_header
      %s19 = sphi 0, %s23
      %p20 = scmp.ge.s32.totalorder %s19, 4
      %s29 = sphi 0, %s31
      %s32 = sphi 0, %s29
      %s33 = sphi 0, %s32
      %s49 = sphi 0, %s33
      %s55 = sphi 0, %s57
      %s58 = sphi 0, %s55
      %s59 = sphi 0, %s58
      %s75 = sphi 0, %s59
      %s79 = sphi 0, %s79
      %s81 = sphi 0, %s79
      %s82 = sphi 0, %s81
      %s96 = sphi 0, %s82
      %s100 = sphi 0, %s100
      %s102 = sphi 0, %s100
      %s103 = sphi 0, %s102
      %s117 = sphi 0, %s103
      %s123 = sphi 0, %s125
      %s126 = sphi 0, %s123
      %s127 = sphi 0, %s126
      %s143 = sphi 0, %s127
    $region4: #{tpu_custom_call.1} parent=1 // loop_header_branch
      %22 = sbr.rel (%p20) target = $region8
    $region5: #{tpu_custom_call.1} parent=1 // loop_body
      %s24 = ssub.s32 %s19, 1
      %s25 = ssub.s32 %s19, 2
      %s26 = sadd.s32 %s19, 1
      %s27 = ssub.s32 %s19, %s26
      %p28 = scmp.eq.s32.totalorder %s27, 0
      %s30 = sadd.s32 %s29, 1
      %s31 = scalar_select %p28, %s29, %s30
      %p34 = pneg %p28
      %p35 = scmp.eq.s32.totalorder %s19, 1
      %p36 = por %p34, %p35
      %p37 = scmp.ne.s32.totalorder %s29, %s32
      %p38 = scmp.eq.s32.totalorder %s19, 0
      %p39 = por %p37, %p38
      %p40 = scmp.ne.s32.totalorder %s29, %s32
      %p41 = scmp.eq.s32.totalorder %s24, 1
      %p42 = por %p40, %p41
      %p43 = scmp.ne.s32.totalorder %s32, %s33
      %p44 = scmp.eq.s32.totalorder %s24, 0
      %p45 = por %p43, %p44
      %p46 = scmp.ne.s32.totalorder %s32, %s33
      %p47 = scmp.eq.s32.totalorder %s25, 1
      %p48 = por %p46, %p47
      %p50 = scmp.ne.s32.totalorder %s33, %s49
      %p51 = scmp.eq.s32.totalorder %s25, 0
      %p52 = por %p50, %p51
      %s53 = ssub.s32 %s19, %s26
      %p54 = scmp.eq.s32.totalorder %s53, 0
      %s56 = sadd.s32 %s55, 1
      %s57 = scalar_select %p54, %s55, %s56
      %p60 = pneg %p54
      %p61 = scmp.eq.s32.totalorder %s19, 1
      %p62 = por %p60, %p61
      %p63 = scmp.ne.s32.totalorder %s55, %s58
      %p64 = scmp.eq.s32.totalorder %s19, 0
      %p65 = por %p63, %p64
      %p66 = scmp.ne.s32.totalorder %s55, %s58
      %p67 = scmp.eq.s32.totalorder %s24, 1
      %p68 = por %p66, %p67
      %p69 = scmp.ne.s32.totalorder %s58, %s59
      %p70 = scmp.eq.s32.totalorder %s24, 0
      %p71 = por %p69, %p70
      %p72 = scmp.ne.s32.totalorder %s58, %s59
      %p73 = scmp.eq.s32.totalorder %s25, 1
      %p74 = por %p72, %p73
      %p76 = scmp.ne.s32.totalorder %s59, %s75
      %p77 = scmp.eq.s32.totalorder %s25, 0
      %p78 = por %p76, %p77
      %s80 = sadd.s32 %s79, 1
      %p83 = scmp.eq.s32.totalorder %s19, 1
      %p84 = scmp.ne.s32.totalorder %s79, %s81
      %p85 = scmp.eq.s32.totalorder %s19, 0
      %p86 = por %p84, %p85
      %p87 = scmp.ne.s32.totalorder %s79, %s81
      %p88 = scmp.eq.s32.totalorder %s24, 1
      %p89 = por %p87, %p88
      %p90 = scmp.ne.s32.totalorder %s81, %s82
      %p91 = scmp.eq.s32.totalorder %s24, 0
      %p92 = por %p90, %p91
      %p93 = scmp.ne.s32.totalorder %s81, %s82
      %p94 = scmp.eq.s32.totalorder %s25, 1
      %p95 = por %p93, %p94
      %p97 = scmp.ne.s32.totalorder %s82, %s96
      %p98 = scmp.eq.s32.totalorder %s25, 0
      %p99 = por %p97, %p98
      %s101 = sadd.s32 %s100, 1
      %p104 = scmp.eq.s32.totalorder %s19, 1
      %p105 = scmp.ne.s32.totalorder %s100, %s102
      %p106 = scmp.eq.s32.totalorder %s19, 0
      %p107 = por %p105, %p106
      %p108 = scmp.ne.s32.totalorder %s100, %s102
      %p109 = scmp.eq.s32.totalorder %s24, 1
      %p110 = por %p108, %p109
      %p111 = scmp.ne.s32.totalorder %s102, %s103
      %p112 = scmp.eq.s32.totalorder %s24, 0
      %p113 = por %p111, %p112
      %p114 = scmp.ne.s32.totalorder %s102, %s103
      %p115 = scmp.eq.s32.totalorder %s25, 1
      %p116 = por %p114, %p115
      %p118 = scmp.ne.s32.totalorder %s103, %s117
      %p119 = scmp.eq.s32.totalorder %s25, 0
      %p120 = por %p118, %p119
      %s121 = ssub.s32 %s19, %s26
      %p122 = scmp.eq.s32.totalorder %s121, 0
      %s124 = sadd.s32 %s123, 1
      %s125 = scalar_select %p122, %s123, %s124
      %p128 = pneg %p122
      %p129 = scmp.eq.s32.totalorder %s19, 1
      %p130 = por %p128, %p129
      %p131 = scmp.ne.s32.totalorder %s123, %s126
      %p132 = scmp.eq.s32.totalorder %s19, 0
      %p133 = por %p131, %p132
      %p134 = scmp.ne.s32.totalorder %s123, %s126
      %p135 = scmp.eq.s32.totalorder %s24, 1
      %p136 = por %p134, %p135
      %p137 = scmp.ne.s32.totalorder %s126, %s127
      %p138 = scmp.eq.s32.totalorder %s24, 0
      %p139 = por %p137, %p138
      %p140 = scmp.ne.s32.totalorder %s126, %s127
      %p141 = scmp.eq.s32.totalorder %s25, 1
      %p142 = por %p140, %p141
      %p144 = scmp.ne.s32.totalorder %s127, %s143
      %p145 = scmp.eq.s32.totalorder %s25, 0
      %p146 = por %p144, %p145
      %p147 = scmp.le.s32.totalorder 1, %s19
      %p148 = scmp.lt.s32.totalorder %s19, 3
      %p149 = pnand %p147, %p148
      %p150 = pneg %p149
      // Predicated region
      $region9: #{tpu_custom_call.1} parent=5 // pred_check
        _
      $region10: #{tpu_custom_call.1} parent=5 // pred_check_branch
        %152 = sbr.rel (%p149) target = $region12
      $region11: #{tpu_custom_call.1} parent=5 // pred_region
        %s153 = ssub.s32 %s19, 1
        // Predicated region
        $region13: #{tpu_custom_call.1} parent=11 // pred_check
          %p154 = pneg %p92
        $region14: #{tpu_custom_call.1} parent=11 // pred_check_branch
          %156 = sbr.rel (%p154) target = $region16
        $region15: #{tpu_custom_call.1} parent=11 // pred_region
          _
        $region16: #{tpu_custom_call.1} parent=11 // pred_fallthru
          _
        // Predicated region
        $region17: #{tpu_custom_call.1} parent=11 // pred_check
          %p157 = pneg %p113
        $region18: #{tpu_custom_call.1} parent=11 // pred_check_branch
          %159 = sbr.rel (%p157) target = $region20
        $region19: #{tpu_custom_call.1} parent=11 // pred_region
          _
        $region20: #{tpu_custom_call.1} parent=11 // pred_fallthru
          _
      $region12: #{tpu_custom_call.1} parent=5 // pred_fallthru
        _
      %p160 = scmp.lt.s32.totalorder %s19, 2
      // Predicated region
      $region21: #{tpu_custom_call.1} parent=5 // pred_check
        %p161 = pneg %p160
      $region22: #{tpu_custom_call.1} parent=5 // pred_check_branch
        %163 = sbr.rel (%p161) target = $region24
      $region23: #{tpu_custom_call.1} parent=5 // pred_region
        // Predicated region
        $region25: #{tpu_custom_call.1} parent=23 // pred_check
          %p164 = pneg %p39
        $region26: #{tpu_custom_call.1} parent=23 // pred_check_branch
          %166 = sbr.rel (%p164) target = $region28
        $region27: #{tpu_custom_call.1} parent=23 // pred_region
          %s167 = sand.u32 %s29, 1
          %s168 = scalar_lea.sflag [#allocation4], %s167
          %s169 = sand.u32 %s29, 1
          %s170 = smul.addr %s169, 16
          %s171 = scalar_lea.vmem [#allocation3], %s170
          %s173 = ssub.s32 256, 256
          %174 = vsyncadd %s168, %s173
          %s175 = smul.addr %s19, 2
          %s176 = smul.addr %s175, 128
          %s177 = scalar_lea.hbm %s0, %s176
          %s178 = sshll.u32 %s171, 4
          %s179 = int_to_ptr.vmem [resolvable:$true] %s178
          %184 = dma.hbm_to_vmem [thread:$0]  %s177, 256, %s179, %s168, 128, 128, 8
        $region28: #{tpu_custom_call.1} parent=23 // pred_fallthru
          _
        // Predicated region
        $region29: #{tpu_custom_call.1} parent=23 // pred_check
          %p185 = pneg %p65
        $region30: #{tpu_custom_call.1} parent=23 // pred_check_branch
          %187 = sbr.rel (%p185) target = $region32
        $region31: #{tpu_custom_call.1} parent=23 // pred_region
          %s188 = sand.u32 %s55, 1
          %s189 = scalar_lea.sflag [#allocation7], %s188
          %s190 = sand.u32 %s55, 1
          %s191 = smul.addr %s190, 16
          %s192 = scalar_lea.vmem [#allocation6], %s191
          %s194 = ssub.s32 256, 256
          %195 = vsyncadd %s189, %s194
          %s196 = smul.addr %s19, 2
          %s197 = smul.addr %s196, 128
          %s198 = scalar_lea.hbm %s1, %s197
          %s199 = sshll.u32 %s192, 4
          %s200 = int_to_ptr.vmem [resolvable:$true] %s199
          %205 = dma.hbm_to_vmem [thread:$0]  %s198, 256, %s200, %s189, 128, 128, 8
        $region32: #{tpu_custom_call.1} parent=23 // pred_fallthru
          _
      $region24: #{tpu_custom_call.1} parent=5 // pred_fallthru
        _
      %p206 = scmp.le.s32.totalorder 1, %s19
      %p207 = scmp.lt.s32.totalorder %s19, 3
      %p208 = pnand %p206, %p207
      %p209 = pneg %p208
      // Predicated region
      $region33: #{tpu_custom_call.1} parent=5 // pred_check
        _
      $region34: #{tpu_custom_call.1} parent=5 // pred_check_branch
        %211 = sbr.rel (%p208) target = $region36
      $region35: #{tpu_custom_call.1} parent=5 // pred_region
        %s212 = ssub.s32 %s19, 1
        %s213 = sand.u32 %s32, 1
        %s214 = scalar_lea.sflag [#allocation4], %s213
        %s215 = sand.u32 %s32, 1
        %s216 = smul.addr %s215, 16
        %s217 = scalar_lea.vmem [#allocation3], %s216
        // Predicated region
        $region37: #{tpu_custom_call.1} parent=35 // pred_check
          %p218 = pneg %p45
        $region38: #{tpu_custom_call.1} parent=35 // pred_check_branch
          %220 = sbr.rel (%p218) target = $region40
        $region39: #{tpu_custom_call.1} parent=35 // pred_region
          %221 = dma.done %s214, 256
        $region40: #{tpu_custom_call.1} parent=35 // pred_fallthru
          _
        %s222 = sand.u32 %s58, 1
        %s223 = scalar_lea.sflag [#allocation7], %s222
        %s224 = sand.u32 %s58, 1
        %s225 = smul.addr %s224, 16
        %s226 = scalar_lea.vmem [#allocation6], %s225
        // Predicated region
        $region41: #{tpu_custom_call.1} parent=35 // pred_check
          %p227 = pneg %p71
        $region42: #{tpu_custom_call.1} parent=35 // pred_check_branch
          %229 = sbr.rel (%p227) target = $region44
        $region43: #{tpu_custom_call.1} parent=35 // pred_region
          %230 = dma.done %s223, 256
        $region44: #{tpu_custom_call.1} parent=35 // pred_fallthru
          _
        %s231 = sand.u32 %s32, 1
        %s232 = scalar_lea.sflag [#allocation4], %s231
        %s233 = sand.u32 %s32, 1
        %s234 = smul.addr %s233, 16
        %s235 = scalar_lea.vmem [#allocation3], %s234
        %p236 = pneg %p45
        %p237 = pneg %p42
        %s238 = sand.u32 %s58, 1
        %s239 = scalar_lea.sflag [#allocation7], %s238
        %s240 = sand.u32 %s58, 1
        %s241 = smul.addr %s240, 16
        %s242 = scalar_lea.vmem [#allocation6], %s241
        %p243 = pneg %p71
        %p244 = pneg %p68
        %p245 = pneg %p92
        %p246 = pneg %p89
        %p247 = pneg %p113
        %p248 = pneg %p110
        %p249 = pneg %p139
        %p250 = pneg %p136
        %s251 = sand.u32 %s126, 1
        %s252 = scalar_lea.sflag [#allocation5], %s251
        %s253 = sand.u32 %s126, 1
        %s254 = smul.addr %s253, 8
        %s255 = scalar_lea.vmem [#allocation8], %s254
        %v256 = vld [vmem:[%s217] sm:$0xff]
        %v257 = vld [vmem:[%s217 + $0x8] sm:$0xff]
        %v258 = vld [vmem:[%s226] sm:$0xff]
        %v259 = vld [vmem:[%s226 + $0x8] sm:$0xff]
        %vm260 = vcmask 130048
        %261 = vst.msk [vmem:[#allocation2] sm:$0xff] %vm260, %v256
        %262 = vst.msk [vmem:[#allocation2 + $0x8] sm:$0xff] %vm260, %v257
        %265 = vrot.lane.b32.xlu0 %v258, 16
        %v266 = vpop.permute.xlu0 %265
        %267 = vrot.lane.b32.xlu0 %v259, 16
        %v268 = vpop.permute.xlu0 %267
        %vm271 = vcmask 261248
        %272 = vst.msk [vmem:[#allocation2] sm:$0xff] %vm271, %v266
        %273 = vst.msk [vmem:[#allocation2 + $0x8] sm:$0xff] %vm271, %v268
        %v274 = vmul.f32 %v256, %v256
        %v275 = vmul.f32 %v257, %v257
        %278 = vrot.lane.b32.xlu0 %v274, 32
        %v279 = vpop.permute.xlu0 %278
        %280 = vrot.lane.b32.xlu0 %v275, 32
        %v281 = vpop.permute.xlu0 %280
        %vm284 = vcmask 392448
        %285 = vst.msk [vmem:[#allocation2] sm:$0xff] %vm284, %v279
        %286 = vst.msk [vmem:[#allocation2 + $0x8] sm:$0xff] %vm284, %v281
        %v287 = vmul.f32 %v258, %v258
        %v288 = vmul.f32 %v259, %v259
        %291 = vrot.lane.b32.xlu0 %v287, 48
        %v292 = vpop.permute.xlu0 %291
        %293 = vrot.lane.b32.xlu0 %v288, 48
        %v294 = vpop.permute.xlu0 %293
        %vm297 = vcmask 523648
        %298 = vst.msk [vmem:[#allocation2] sm:$0xff] %vm297, %v292
        %299 = vst.msk [vmem:[#allocation2 + $0x8] sm:$0xff] %vm297, %v294
        %v300 = vmul.f32 %v256, %v258
        %v301 = vmul.f32 %v257, %v259
        %304 = vrot.lane.b32.xlu0 %v300, 64
        %v305 = vpop.permute.xlu0 %304
        %306 = vrot.lane.b32.xlu0 %v301, 64
        %v307 = vpop.permute.xlu0 %306
        %vm310 = vcmask 654848
        %311 = vst.msk [vmem:[#allocation2] sm:$0xff] %vm310, %v305
        %312 = vst.msk [vmem:[#allocation2 + $0x8] sm:$0xff] %vm310, %v307
        %v313 = vsub.f32 %v256, %v258
        %v314 = vsub.f32 %v257, %v259
        %v315 = vand.u32 2147483647, %v313
        %v316 = vand.u32 2147483647, %v314
        %319 = vrot.lane.b32.xlu0 %v315, 80
        %v320 = vpop.permute.xlu0 %319
        %321 = vrot.lane.b32.xlu0 %v316, 80
        %v322 = vpop.permute.xlu0 %321
        %vm325 = vcmask 786048
        %326 = vst.msk [vmem:[#allocation2] sm:$0xff] %vm325, %v320
        %327 = vst.msk [vmem:[#allocation2 + $0x8] sm:$0xff] %vm325, %v322
        %v328 = vld [vmem:[%s2] sm:$0xff]
        %v329 = vld [vmem:[%s2 + $0x8] sm:$0xff]
        %v330 = vld [vmem:[%s2 + $0x10] sm:$0xff]
        %v331 = vld [vmem:[%s2 + $0x18] sm:$0xff]
        %v332 = vld [vmem:[%s2 + $0x20] sm:$0xff]
        %v333 = vld [vmem:[%s2 + $0x28] sm:$0xff]
        %v334 = vld [vmem:[%s2 + $0x30] sm:$0xff]
        %v335 = vld [vmem:[%s2 + $0x38] sm:$0xff]
        %v336 = vld [vmem:[%s2 + $0x40] sm:$0xff]
        %v337 = vld [vmem:[%s2 + $0x48] sm:$0xff]
        %v338 = vld [vmem:[#allocation2] sm:$0xff]
        %v339 = vld [vmem:[#allocation2 + $0x8] sm:$0xff]
        %v341 = vsel %vm260, %v328, 0
        %v344 = vsel %vm260, %v329, 0
        %v347 = vsel %vm260, %v330, 0
        %v350 = vsel %vm260, %v331, 0
        %v353 = vsel %vm260, %v332, 0
        %v356 = vsel %vm260, %v333, 0
        %v359 = vsel %vm260, %v334, 0
        %v362 = vsel %vm260, %v335, 0
        %v365 = vsel %vm260, %v336, 0
        %v368 = vsel %vm260, %v337, 0
        %370 = vmatprep.subr.mxu0 0.0
        %371 = vmatpush1.msra.mxu0 %v338
        %372 = vmatprep.subr.mxu0 0.0
        %373 = vmatpush1.msra.mxu0 %v339
        %374 = vmatprep.subr.mxu0 0.0
        %375 = vmatpush1.msra.mxu0 0.0
        %376 = vmatprep.subr.mxu0 0.0
        %377 = vmatpush1.msra.mxu0 0.0
        %378 = vmatprep.subr.mxu0 0.0
        %379 = vmatpush1.msra.mxu0 0.0
        %380 = vmatprep.subr.mxu0 0.0
        %381 = vmatpush1.msra.mxu0 0.0
        %382 = vmatprep.subr.mxu0 0.0
        %383 = vmatpush1.msra.mxu0 0.0
        %384 = vmatprep.subr.mxu0 0.0
        %385 = vmatpush1.msra.mxu0 0.0
        %386 = vmatprep.subr.mxu0 0.0
        %387 = vmatpush1.msra.mxu0 0.0
        %388 = vmatprep.subr.mxu0 0.0
        %389 = vmatpush1.msra.mxu0 0.0
        %390 = vmatprep.subr.mxu0 0.0
        %391 = vmatpush1.msra.mxu0 0.0
        %392 = vmatprep.subr.mxu0 0.0
        %393 = vmatpush1.msra.mxu0 0.0
        %394 = vmatprep.subr.mxu0 0.0
        %395 = vmatpush1.msra.mxu0 0.0
        %396 = vmatprep.subr.mxu0 0.0
        %397 = vmatpush1.msra.mxu0 0.0
        %398 = vmatprep.subr.mxu0 0.0
        %399 = vmatpush1.msra.mxu0 0.0
        %400 = vmatprep.subr.mxu0 0.0
        %401 = vmatpush1.msra.mxu0 0.0
        %402 = vmatprep.subr.mxu0 0.0
        %403 = vmatpush1.msra.mxu0 0.0
        %404 = vmatprep.subr.mxu0 0.0
        %405 = vmatpush1.msra.mxu0 0.0
        %406 = vmatprep.subr.mxu0 0.0
        %407 = vmatpush1.msra.mxu0 0.0
        %408 = vmatprep.subr.mxu0 0.0
        %409 = vmatpush1.msra.mxu0 0.0
        %410 = vmatprep.subr.mxu0 0.0
        %411 = vmatpush1.msra.mxu0 0.0
        %412 = vmatprep.subr.mxu0 0.0
        %413 = vmatpush1.msra.mxu0 0.0
        %414 = vmatprep.subr.mxu0 0.0
        %415 = vmatpush1.msra.mxu0 0.0
        %416 = vmatprep.subr.mxu0 0.0
        %417 = vmatpush1.msra.mxu0 0.0
        %418 = vmatprep.subr.mxu0 0.0
        %419 = vmatpush1.msra.mxu0 0.0
        %420 = vmatprep.subr.mxu0 0.0
        %421 = vmatpush1.msra.mxu0 0.0
        %422 = vmatprep.subr.mxu0 0.0
        %423 = vmatpush1.msra.mxu0 0.0
        %424 = vmatprep.subr.mxu0 0.0
        %425 = vmatpush1.msra.mxu0 0.0
        %426 = vmatprep.subr.mxu0 0.0
        %427 = vmatpush1.msra.mxu0 0.0
        %428 = vmatprep.subr.mxu0 0.0
        %429 = vmatpush1.msra.mxu0 0.0
        %430 = vmatprep.subr.mxu0 0.0
        %431 = vmatpush1.msra.mxu0 0.0
        %432 = vmatprep.subr.mxu0 0.0
        %433 = vmatpush1.msra.mxu0 0.0
        %434 = vmatprep.mubr.f32.mxu0 0.0
        %435 = vmatmul.mubr.f32.gmra.mrb[0].mxu0 %v341
        %v436 = vpop.f32.mrb[0].mxu0
        %v437 = vadd.f32 0.0, %v436
        %v438 = vpop.f32.mrb[0].mxu0
        %439 = vmatprep.mubr.f32.mxu0 0.0
        %440 = vmatmul.mubr.f32.gmra.mrb[0].mxu0 %v344
        %v441 = vpop.f32.mrb[0].mxu0
        %v442 = vadd.f32 0.0, %v441
        %v443 = vpop.f32.mrb[0].mxu0
        %444 = vmatprep.mubr.f32.mxu0 0.0
        %445 = vmatmul.mubr.f32.gmra.mrb[0].mxu0 %v347
        %v446 = vpop.f32.mrb[0].mxu0
        %v447 = vadd.f32 0.0, %v446
        %v448 = vpop.f32.mrb[0].mxu0
        %449 = vmatprep.mubr.f32.mxu0 0.0
        %450 = vmatmul.mubr.f32.gmra.mrb[0].mxu0 %v350
        %v451 = vpop.f32.mrb[0].mxu0
        %v452 = vadd.f32 0.0, %v451
        %v453 = vpop.f32.mrb[0].mxu0
        %454 = vmatprep.mubr.f32.mxu0 0.0
        %455 = vmatmul.mubr.f32.gmra.mrb[0].mxu0 %v353
        %v456 = vpop.f32.mrb[0].mxu0
        %v457 = vadd.f32 0.0, %v456
        %v458 = vpop.f32.mrb[0].mxu0
        %459 = vmatprep.mubr.f32.mxu0 0.0
        %460 = vmatmul.mubr.f32.gmra.mrb[0].mxu0 %v356
        %v461 = vpop.f32.mrb[0].mxu0
        %v462 = vadd.f32 0.0, %v461
        %v463 = vpop.f32.mrb[0].mxu0
        %464 = vmatprep.mubr.f32.mxu0 0.0
        %465 = vmatmul.mubr.f32.gmra.mrb[0].mxu0 %v359
        %v466 = vpop.f32.mrb[0].mxu0
        %v467 = vadd.f32 0.0, %v466
        %v468 = vpop.f32.mrb[0].mxu0
        %469 = vmatprep.mubr.f32.mxu0 0.0
        %470 = vmatmul.mubr.f32.gmra.mrb[0].mxu0 %v362
        %v471 = vpop.f32.mrb[0].mxu0
        %v472 = vadd.f32 0.0, %v471
        %v473 = vpop.f32.mrb[0].mxu0
        %474 = vmatprep.mubr.f32.mxu0 0.0
        %475 = vmatmul.mubr.f32.gmra.mrb[0].mxu0 %v365
        %v476 = vpop.f32.mrb[0].mxu0
        %v477 = vadd.f32 0.0, %v476
        %v478 = vpop.f32.mrb[0].mxu0
        %479 = vmatprep.mubr.f32.mxu0 0.0
        %480 = vmatmul.mubr.f32.gmra.mrb[0].mxu0 %v368
        %v481 = vpop.f32.mrb[0].mxu0
        %v482 = vadd.f32 0.0, %v481
        %v483 = vpop.f32.mrb[0].mxu0
        %484 = vdwg.mxu0
        %487 = vrot.lane.b32.xlu0 %v437, 112
        %v488 = vpop.permute.xlu0 %487
        %489 = vrot.lane.b32.xlu0 %v442, 112
        %v490 = vpop.permute.xlu0 %489
        %491 = vrot.lane.b32.xlu0 %v437, 96
        %v492 = vpop.permute.xlu0 %491
        %493 = vrot.lane.b32.xlu0 %v442, 96
        %v494 = vpop.permute.xlu0 %493
        %495 = vrot.lane.b32.xlu0 %v437, 80
        %v496 = vpop.permute.xlu0 %495
        %497 = vrot.lane.b32.xlu0 %v442, 80
        %v498 = vpop.permute.xlu0 %497
        %499 = vrot.lane.b32.xlu0 %v437, 64
        %v500 = vpop.permute.xlu0 %499
        %501 = vrot.lane.b32.xlu0 %v442, 64
        %v502 = vpop.permute.xlu0 %501
        %503 = vrot.lane.b32.xlu0 %v437, 48
        %v504 = vpop.permute.xlu0 %503
        %505 = vrot.lane.b32.xlu0 %v442, 48
        %v506 = vpop.permute.xlu0 %505
        %v507 = vld [vmem:[%s3] sm:$0xff]
        %v508 = vld [vmem:[%s3 + $0x8] sm:$0xff]
        %v509 = vsel %vm260, %v437, 0
        %v511 = vsel %vm260, %v442, 0
        %v513 = vsel %vm260, %v488, 0
        %v515 = vsel %vm260, %v490, 0
        %v517 = vsel %vm260, %v492, 0
        %v519 = vsel %vm260, %v494, 0
        %v521 = vsel %vm260, %v496, 0
        %v523 = vsel %vm260, %v498, 0
        %v525 = vsel %vm260, %v500, 0
        %v527 = vsel %vm260, %v502, 0
        %v529 = vsel %vm260, %v504, 0
        %v531 = vsel %vm260, %v506, 0
        %533 = vmatprep.subr.mxu0 0.0
        %534 = vmatpush1.msra.mxu0 %v507
        %535 = vmatprep.subr.mxu0 0.0
        %536 = vmatpush1.msra.mxu0 %v508
        %537 = vmatprep.subr.mxu0 0.0
        %538 = vmatpush1.msra.mxu0 0.0
        %539 = vmatprep.subr.mxu0 0.0
        %540 = vmatpush1.msra.mxu0 0.0
        %541 = vmatprep.subr.mxu0 0.0
        %542 = vmatpush1.msra.mxu0 0.0
        %543 = vmatprep.subr.mxu0 0.0
        %544 = vmatpush1.msra.mxu0 0.0
        %545 = vmatprep.subr.mxu0 0.0
        %546 = vmatpush1.msra.mxu0 0.0
        %547 = vmatprep.subr.mxu0 0.0
        %548 = vmatpush1.msra.mxu0 0.0
        %549 = vmatprep.subr.mxu0 0.0
        %550 = vmatpush1.msra.mxu0 0.0
        %551 = vmatprep.subr.mxu0 0.0
        %552 = vmatpush1.msra.mxu0 0.0
        %553 = vmatprep.subr.mxu0 0.0
        %554 = vmatpush1.msra.mxu0 0.0
        %555 = vmatprep.subr.mxu0 0.0
        %556 = vmatpush1.msra.mxu0 0.0
        %557 = vmatprep.subr.mxu0 0.0
        %558 = vmatpush1.msra.mxu0 0.0
        %559 = vmatprep.subr.mxu0 0.0
        %560 = vmatpush1.msra.mxu0 0.0
        %561 = vmatprep.subr.mxu0 0.0
        %562 = vmatpush1.msra.mxu0 0.0
        %563 = vmatprep.subr.mxu0 0.0
        %564 = vmatpush1.msra.mxu0 0.0
        %565 = vmatprep.subr.mxu0 0.0
        %566 = vmatpush1.msra.mxu0 0.0
        %567 = vmatprep.subr.mxu0 0.0
        %568 = vmatpush1.msra.mxu0 0.0
        %569 = vmatprep.subr.mxu0 0.0
        %570 = vmatpush1.msra.mxu0 0.0
        %571 = vmatprep.subr.mxu0 0.0
        %572 = vmatpush1.msra.mxu0 0.0
        %573 = vmatprep.subr.mxu0 0.0
        %574 = vmatpush1.msra.mxu0 0.0
        %575 = vmatprep.subr.mxu0 0.0
        %576 = vmatpush1.msra.mxu0 0.0
        %577 = vmatprep.subr.mxu0 0.0
        %578 = vmatpush1.msra.mxu0 0.0
        %579 = vmatprep.subr.mxu0 0.0
        %580 = vmatpush1.msra.mxu0 0.0
        %581 = vmatprep.subr.mxu0 0.0
        %582 = vmatpush1.msra.mxu0 0.0
        %583 = vmatprep.subr.mxu0 0.0
        %584 = vmatpush1.msra.mxu0 0.0
        %585 = vmatprep.subr.mxu0 0.0
        %586 = vmatpush1.msra.mxu0 0.0
        %587 = vmatprep.subr.mxu0 0.0
        %588 = vmatpush1.msra.mxu0 0.0
        %589 = vmatprep.subr.mxu0 0.0
        %590 = vmatpush1.msra.mxu0 0.0
        %591 = vmatprep.subr.mxu0 0.0
        %592 = vmatpush1.msra.mxu0 0.0
        %593 = vmatprep.subr.mxu0 0.0
        %594 = vmatpush1.msra.mxu0 0.0
        %595 = vmatprep.subr.mxu0 0.0
        %596 = vmatpush1.msra.mxu0 0.0
        %597 = vmatprep.mubr.f32.mxu0 0.0
        %598 = vmatmul.mubr.f32.gmra.mrb[0].mxu0 %v509
        %v599 = vpop.f32.mrb[0].mxu0
        %v600 = vadd.f32 0.0, %v599
        %v601 = vpop.f32.mrb[0].mxu0
        %602 = vmatprep.mubr.f32.mxu0 0.0
        %603 = vmatmul.mubr.f32.gmra.mrb[0].mxu0 %v511
        %v604 = vpop.f32.mrb[0].mxu0
        %v605 = vadd.f32 0.0, %v604
        %v606 = vpop.f32.mrb[0].mxu0
        %607 = vmatprep.mubr.f32.mxu0 0.0
        %608 = vmatmul.mubr.f32.gmra.mrb[0].mxu0 %v513
        %v609 = vpop.f32.mrb[0].mxu0
        %v610 = vadd.f32 0.0, %v609
        %v611 = vpop.f32.mrb[0].mxu0
        %612 = vmatprep.mubr.f32.mxu0 0.0
        %613 = vmatmul.mubr.f32.gmra.mrb[0].mxu0 %v515
        %v614 = vpop.f32.mrb[0].mxu0
        %v615 = vadd.f32 0.0, %v614
        %v616 = vpop.f32.mrb[0].mxu0
        %617 = vmatprep.mubr.f32.mxu0 0.0
        %618 = vmatmul.mubr.f32.gmra.mrb[0].mxu0 %v517
        %v619 = vpop.f32.mrb[0].mxu0
        %v620 = vadd.f32 0.0, %v619
        %v621 = vpop.f32.mrb[0].mxu0
        %622 = vmatprep.mubr.f32.mxu0 0.0
        %623 = vmatmul.mubr.f32.gmra.mrb[0].mxu0 %v519
        %v624 = vpop.f32.mrb[0].mxu0
        %v625 = vadd.f32 0.0, %v624
        %v626 = vpop.f32.mrb[0].mxu0
        %627 = vmatprep.mubr.f32.mxu0 0.0
        %628 = vmatmul.mubr.f32.gmra.mrb[0].mxu0 %v521
        %v629 = vpop.f32.mrb[0].mxu0
        %v630 = vadd.f32 0.0, %v629
        %v631 = vpop.f32.mrb[0].mxu0
        %632 = vmatprep.mubr.f32.mxu0 0.0
        %633 = vmatmul.mubr.f32.gmra.mrb[0].mxu0 %v523
        %v634 = vpop.f32.mrb[0].mxu0
        %v635 = vadd.f32 0.0, %v634
        %v636 = vpop.f32.mrb[0].mxu0
        %637 = vmatprep.mubr.f32.mxu0 0.0
        %638 = vmatmul.mubr.f32.gmra.mrb[0].mxu0 %v525
        %v639 = vpop.f32.mrb[0].mxu0
        %v640 = vadd.f32 0.0, %v639
        %v641 = vpop.f32.mrb[0].mxu0
        %642 = vmatprep.mubr.f32.mxu0 0.0
        %643 = vmatmul.mubr.f32.gmra.mrb[0].mxu0 %v527
        %v644 = vpop.f32.mrb[0].mxu0
        %v645 = vadd.f32 0.0, %v644
        %v646 = vpop.f32.mrb[0].mxu0
        %647 = vmatprep.mubr.f32.mxu0 0.0
        %648 = vmatmul.mubr.f32.gmra.mrb[0].mxu0 %v529
        %v649 = vpop.f32.mrb[0].mxu0
        %v650 = vpop.f32.mrb[0].mxu0
        %651 = vmatprep.mubr.f32.mxu0 0.0
        %652 = vmatmul.mubr.f32.gmra.mrb[0].mxu0 %v531
        %v653 = vpop.f32.mrb[0].mxu0
        %v654 = vpop.f32.mrb[0].mxu0
        %655 = vdwg.mxu0
        %v656 = vmul.f32 %v600, %v600
        %v657 = vmul.f32 %v605, %v605
        %v658 = vmul.f32 %v610, %v610
        %v659 = vmul.f32 %v615, %v615
        %v660 = vmul.f32 %v600, %v610
        %v661 = vmul.f32 %v605, %v615
        %v662 = vsub.f32 %v620, %v656
        %v663 = vsub.f32 %v625, %v657
        %v664 = vsub.f32 %v630, %v658
        %v665 = vsub.f32 %v635, %v659
        %v666 = vsub.f32 %v640, %v660
        %v667 = vsub.f32 %v645, %v661
        %v668 = vmul.f32 %v666, 2.0
        %v669 = vmul.f32 %v667, 2.0
        %v670 = vadd.f32 %v668, 0.0009
        %v671 = vadd.f32 %v669, 0.0009
        %v672 = vadd.f32 %v662, %v664
        %v673 = vadd.f32 %v663, %v665
        %v674 = vadd.f32 %v672, 0.0009
        %v675 = vadd.f32 %v673, 0.0009
        %v676 = vrcp.pop %v674
        %v677 = vrcp.pop %v675
        %v678 = vmul.f32 %v670, %v676
        %v679 = vmul.f32 %v671, %v677
        %v680 = vmul.f32 %v678, %v678
        %v681 = vmul.f32 %v679, %v679
        %v682 = vmul.f32 %v680, %v678
        %v683 = vmul.f32 %v681, %v679
        %686 = vrot.lane.b32.xlu0 %v447, 112
        %v687 = vpop.permute.xlu0 %686
        %688 = vrot.lane.b32.xlu0 %v452, 112
        %v689 = vpop.permute.xlu0 %688
        %690 = vrot.lane.b32.xlu0 %v447, 96
        %v691 = vpop.permute.xlu0 %690
        %692 = vrot.lane.b32.xlu0 %v452, 96
        %v693 = vpop.permute.xlu0 %692
        %694 = vrot.lane.b32.xlu0 %v447, 80
        %v695 = vpop.permute.xlu0 %694
        %696 = vrot.lane.b32.xlu0 %v452, 80
        %v697 = vpop.permute.xlu0 %696
        %698 = vrot.lane.b32.xlu0 %v447, 64
        %v699 = vpop.permute.xlu0 %698
        %700 = vrot.lane.b32.xlu0 %v452, 64
        %v701 = vpop.permute.xlu0 %700
        %702 = vrot.lane.b32.xlu0 %v447, 48
        %v703 = vpop.permute.xlu0 %702
        %704 = vrot.lane.b32.xlu0 %v452, 48
        %v705 = vpop.permute.xlu0 %704
        %s706 = scalar_lea.vmem %s3, 16
        %v707 = vld [vmem:[%s706] sm:$0xff]
        %v708 = vld [vmem:[%s706 + $0x8] sm:$0xff]
        %v709 = vsel %vm260, %v447, 0
        %v711 = vsel %vm260, %v452, 0
        %v713 = vsel %vm260, %v687, 0
        %v715 = vsel %vm260, %v689, 0
        %v717 = vsel %vm260, %v691, 0
        %v719 = vsel %vm260, %v693, 0
        %v721 = vsel %vm260, %v695, 0
        %v723 = vsel %vm260, %v697, 0
        %v725 = vsel %vm260, %v699, 0
        %v727 = vsel %vm260, %v701, 0
        %v729 = vsel %vm260, %v703, 0
        %v731 = vsel %vm260, %v705, 0
        %733 = vmatprep.subr.mxu0 0.0
        %734 = vmatpush1.msra.mxu0 %v707
        %735 = vmatprep.subr.mxu0 0.0
        %736 = vmatpush1.msra.mxu0 %v708
        %737 = vmatprep.subr.mxu0 0.0
        %738 = vmatpush1.msra.mxu0 0.0
        %739 = vmatprep.subr.mxu0 0.0
        %740 = vmatpush1.msra.mxu0 0.0
        %741 = vmatprep.subr.mxu0 0.0
        %742 = vmatpush1.msra.mxu0 0.0
        %743 = vmatprep.subr.mxu0 0.0
        %744 = vmatpush1.msra.mxu0 0.0
        %745 = vmatprep.subr.mxu0 0.0
        %746 = vmatpush1.msra.mxu0 0.0
        %747 = vmatprep.subr.mxu0 0.0
        %748 = vmatpush1.msra.mxu0 0.0
        %749 = vmatprep.subr.mxu0 0.0
        %750 = vmatpush1.msra.mxu0 0.0
        %751 = vmatprep.subr.mxu0 0.0
        %752 = vmatpush1.msra.mxu0 0.0
        %753 = vmatprep.subr.mxu0 0.0
        %754 = vmatpush1.msra.mxu0 0.0
        %755 = vmatprep.subr.mxu0 0.0
        %756 = vmatpush1.msra.mxu0 0.0
        %757 = vmatprep.subr.mxu0 0.0
        %758 = vmatpush1.msra.mxu0 0.0
        %759 = vmatprep.subr.mxu0 0.0
        %760 = vmatpush1.msra.mxu0 0.0
        %761 = vmatprep.subr.mxu0 0.0
        %762 = vmatpush1.msra.mxu0 0.0
        %763 = vmatprep.subr.mxu0 0.0
        %764 = vmatpush1.msra.mxu0 0.0
        %765 = vmatprep.subr.mxu0 0.0
        %766 = vmatpush1.msra.mxu0 0.0
        %767 = vmatprep.subr.mxu0 0.0
        %768 = vmatpush1.msra.mxu0 0.0
        %769 = vmatprep.subr.mxu0 0.0
        %770 = vmatpush1.msra.mxu0 0.0
        %771 = vmatprep.subr.mxu0 0.0
        %772 = vmatpush1.msra.mxu0 0.0
        %773 = vmatprep.subr.mxu0 0.0
        %774 = vmatpush1.msra.mxu0 0.0
        %775 = vmatprep.subr.mxu0 0.0
        %776 = vmatpush1.msra.mxu0 0.0
        %777 = vmatprep.subr.mxu0 0.0
        %778 = vmatpush1.msra.mxu0 0.0
        %779 = vmatprep.subr.mxu0 0.0
        %780 = vmatpush1.msra.mxu0 0.0
        %781 = vmatprep.subr.mxu0 0.0
        %782 = vmatpush1.msra.mxu0 0.0
        %783 = vmatprep.subr.mxu0 0.0
        %784 = vmatpush1.msra.mxu0 0.0
        %785 = vmatprep.subr.mxu0 0.0
        %786 = vmatpush1.msra.mxu0 0.0
        %787 = vmatprep.subr.mxu0 0.0
        %788 = vmatpush1.msra.mxu0 0.0
        %789 = vmatprep.subr.mxu0 0.0
        %790 = vmatpush1.msra.mxu0 0.0
        %791 = vmatprep.subr.mxu0 0.0
        %792 = vmatpush1.msra.mxu0 0.0
        %793 = vmatprep.subr.mxu0 0.0
        %794 = vmatpush1.msra.mxu0 0.0
        %795 = vmatprep.subr.mxu0 0.0
        %796 = vmatpush1.msra.mxu0 0.0
        %797 = vmatprep.mubr.f32.mxu0 0.0
        %798 = vmatmul.mubr.f32.gmra.mrb[0].mxu0 %v709
        %v799 = vpop.f32.mrb[0].mxu0
        %v800 = vadd.f32 0.0, %v799
        %v801 = vpop.f32.mrb[0].mxu0
        %802 = vmatprep.mubr.f32.mxu0 0.0
        %803 = vmatmul.mubr.f32.gmra.mrb[0].mxu0 %v711
        %v804 = vpop.f32.mrb[0].mxu0
        %v805 = vadd.f32 0.0, %v804
        %v806 = vpop.f32.mrb[0].mxu0
        %807 = vmatprep.mubr.f32.mxu0 0.0
        %808 = vmatmul.mubr.f32.gmra.mrb[0].mxu0 %v713
        %v809 = vpop.f32.mrb[0].mxu0
        %v810 = vadd.f32 0.0, %v809
        %v811 = vpop.f32.mrb[0].mxu0
        %812 = vmatprep.mubr.f32.mxu0 0.0
        %813 = vmatmul.mubr.f32.gmra.mrb[0].mxu0 %v715
        %v814 = vpop.f32.mrb[0].mxu0
        %v815 = vadd.f32 0.0, %v814
        %v816 = vpop.f32.mrb[0].mxu0
        %817 = vmatprep.mubr.f32.mxu0 0.0
        %818 = vmatmul.mubr.f32.gmra.mrb[0].mxu0 %v717
        %v819 = vpop.f32.mrb[0].mxu0
        %v820 = vadd.f32 0.0, %v819
        %v821 = vpop.f32.mrb[0].mxu0
        %822 = vmatprep.mubr.f32.mxu0 0.0
        %823 = vmatmul.mubr.f32.gmra.mrb[0].mxu0 %v719
        %v824 = vpop.f32.mrb[0].mxu0
        %v825 = vadd.f32 0.0, %v824
        %v826 = vpop.f32.mrb[0].mxu0
        %827 = vmatprep.mubr.f32.mxu0 0.0
        %828 = vmatmul.mubr.f32.gmra.mrb[0].mxu0 %v721
        %v829 = vpop.f32.mrb[0].mxu0
        %v830 = vadd.f32 0.0, %v829
        %v831 = vpop.f32.mrb[0].mxu0
        %832 = vmatprep.mubr.f32.mxu0 0.0
        %833 = vmatmul.mubr.f32.gmra.mrb[0].mxu0 %v723
        %v834 = vpop.f32.mrb[0].mxu0
        %v835 = vadd.f32 0.0, %v834
        %v836 = vpop.f32.mrb[0].mxu0
        %837 = vmatprep.mubr.f32.mxu0 0.0
        %838 = vmatmul.mubr.f32.gmra.mrb[0].mxu0 %v725
        %v839 = vpop.f32.mrb[0].mxu0
        %v840 = vadd.f32 0.0, %v839
        %v841 = vpop.f32.mrb[0].mxu0
        %842 = vmatprep.mubr.f32.mxu0 0.0
        %843 = vmatmul.mubr.f32.gmra.mrb[0].mxu0 %v727
        %v844 = vpop.f32.mrb[0].mxu0
        %v845 = vadd.f32 0.0, %v844
        %v846 = vpop.f32.mrb[0].mxu0
        %847 = vmatprep.mubr.f32.mxu0 0.0
        %848 = vmatmul.mubr.f32.gmra.mrb[0].mxu0 %v729
        %v849 = vpop.f32.mrb[0].mxu0
        %v850 = vpop.f32.mrb[0].mxu0
        %851 = vmatprep.mubr.f32.mxu0 0.0
        %852 = vmatmul.mubr.f32.gmra.mrb[0].mxu0 %v731
        %v853 = vpop.f32.mrb[0].mxu0
        %v854 = vpop.f32.mrb[0].mxu0
        %855 = vdwg.mxu0
        %v856 = vmul.f32 %v800, %v800
        %v857 = vmul.f32 %v805, %v805
        %v858 = vmul.f32 %v810, %v810
        %v859 = vmul.f32 %v815, %v815
        %v860 = vmul.f32 %v800, %v810
        %v861 = vmul.f32 %v805, %v815
        %v862 = vsub.f32 %v820, %v856
        %v863 = vsub.f32 %v825, %v857
        %v864 = vsub.f32 %v830, %v858
        %v865 = vsub.f32 %v835, %v859
        %v866 = vsub.f32 %v840, %v860
        %v867 = vsub.f32 %v845, %v861
        %v868 = vmul.f32 %v866, 2.0
        %v869 = vmul.f32 %v867, 2.0
        %v870 = vadd.f32 %v868, 0.0009
        %v871 = vadd.f32 %v869, 0.0009
        %v872 = vadd.f32 %v862, %v864
        %v873 = vadd.f32 %v863, %v865
        %v874 = vadd.f32 %v872, 0.0009
        %v875 = vadd.f32 %v873, 0.0009
        %v876 = vrcp.pop %v874
        %v877 = vrcp.pop %v875
        %v878 = vmul.f32 %v870, %v876
        %v879 = vmul.f32 %v871, %v877
        %v880 = vmul.f32 %v878, %v878
        %v881 = vmul.f32 %v879, %v879
        %v882 = vmul.f32 %v880, %v878
        %v883 = vmul.f32 %v881, %v879
        %v884 = vmul.f32 %v682, %v882
        %v885 = vmul.f32 %v683, %v883
        %888 = vrot.lane.b32.xlu0 %v457, 112
        %v889 = vpop.permute.xlu0 %888
        %890 = vrot.lane.b32.xlu0 %v462, 112
        %v891 = vpop.permute.xlu0 %890
        %892 = vrot.lane.b32.xlu0 %v457, 96
        %v893 = vpop.permute.xlu0 %892
        %894 = vrot.lane.b32.xlu0 %v462, 96
        %v895 = vpop.permute.xlu0 %894
        %896 = vrot.lane.b32.xlu0 %v457, 80
        %v897 = vpop.permute.xlu0 %896
        %898 = vrot.lane.b32.xlu0 %v462, 80
        %v899 = vpop.permute.xlu0 %898
        %900 = vrot.lane.b32.xlu0 %v457, 64
        %v901 = vpop.permute.xlu0 %900
        %902 = vrot.lane.b32.xlu0 %v462, 64
        %v903 = vpop.permute.xlu0 %902
        %904 = vrot.lane.b32.xlu0 %v457, 48
        %v905 = vpop.permute.xlu0 %904
        %906 = vrot.lane.b32.xlu0 %v462, 48
        %v907 = vpop.permute.xlu0 %906
        %s908 = scalar_lea.vmem %s3, 32
        %v909 = vld [vmem:[%s908] sm:$0xff]
        %v910 = vld [vmem:[%s908 + $0x8] sm:$0xff]
        %v911 = vsel %vm260, %v457, 0
        %v913 = vsel %vm260, %v462, 0
        %v915 = vsel %vm260, %v889, 0
        %v917 = vsel %vm260, %v891, 0
        %v919 = vsel %vm260, %v893, 0
        %v921 = vsel %vm260, %v895, 0
        %v923 = vsel %vm260, %v897, 0
        %v925 = vsel %vm260, %v899, 0
        %v927 = vsel %vm260, %v901, 0
        %v929 = vsel %vm260, %v903, 0
        %v931 = vsel %vm260, %v905, 0
        %v933 = vsel %vm260, %v907, 0
        %935 = vmatprep.subr.mxu0 0.0
        %936 = vmatpush1.msra.mxu0 %v909
        %937 = vmatprep.subr.mxu0 0.0
        %938 = vmatpush1.msra.mxu0 %v910
        %939 = vmatprep.subr.mxu0 0.0
        %940 = vmatpush1.msra.mxu0 0.0
        %941 = vmatprep.subr.mxu0 0.0
        %942 = vmatpush1.msra.mxu0 0.0
        %943 = vmatprep.subr.mxu0 0.0
        %944 = vmatpush1.msra.mxu0 0.0
        %945 = vmatprep.subr.mxu0 0.0
        %946 = vmatpush1.msra.mxu0 0.0
        %947 = vmatprep.subr.mxu0 0.0
        %948 = vmatpush1.msra.mxu0 0.0
        %949 = vmatprep.subr.mxu0 0.0
        %950 = vmatpush1.msra.mxu0 0.0
        %951 = vmatprep.subr.mxu0 0.0
        %952 = vmatpush1.msra.mxu0 0.0
        %953 = vmatprep.subr.mxu0 0.0
        %954 = vmatpush1.msra.mxu0 0.0
        %955 = vmatprep.subr.mxu0 0.0
        %956 = vmatpush1.msra.mxu0 0.0
        %957 = vmatprep.subr.mxu0 0.0
        %958 = vmatpush1.msra.mxu0 0.0
        %959 = vmatprep.subr.mxu0 0.0
        %960 = vmatpush1.msra.mxu0 0.0
        %961 = vmatprep.subr.mxu0 0.0
        %962 = vmatpush1.msra.mxu0 0.0
        %963 = vmatprep.subr.mxu0 0.0
        %964 = vmatpush1.msra.mxu0 0.0
        %965 = vmatprep.subr.mxu0 0.0
        %966 = vmatpush1.msra.mxu0 0.0
        %967 = vmatprep.subr.mxu0 0.0
        %968 = vmatpush1.msra.mxu0 0.0
        %969 = vmatprep.subr.mxu0 0.0
        %970 = vmatpush1.msra.mxu0 0.0
        %971 = vmatprep.subr.mxu0 0.0
        %972 = vmatpush1.msra.mxu0 0.0
        %973 = vmatprep.subr.mxu0 0.0
        %974 = vmatpush1.msra.mxu0 0.0
        %975 = vmatprep.subr.mxu0 0.0
        %976 = vmatpush1.msra.mxu0 0.0
        %977 = vmatprep.subr.mxu0 0.0
        %978 = vmatpush1.msra.mxu0 0.0
        %979 = vmatprep.subr.mxu0 0.0
        %980 = vmatpush1.msra.mxu0 0.0
        %981 = vmatprep.subr.mxu0 0.0
        %982 = vmatpush1.msra.mxu0 0.0
        %983 = vmatprep.subr.mxu0 0.0
        %984 = vmatpush1.msra.mxu0 0.0
        %985 = vmatprep.subr.mxu0 0.0
        %986 = vmatpush1.msra.mxu0 0.0
        %987 = vmatprep.subr.mxu0 0.0
        %988 = vmatpush1.msra.mxu0 0.0
        %989 = vmatprep.subr.mxu0 0.0
        %990 = vmatpush1.msra.mxu0 0.0
        %991 = vmatprep.subr.mxu0 0.0
        %992 = vmatpush1.msra.mxu0 0.0
        %993 = vmatprep.subr.mxu0 0.0
        %994 = vmatpush1.msra.mxu0 0.0
        %995 = vmatprep.subr.mxu0 0.0
        %996 = vmatpush1.msra.mxu0 0.0
        %997 = vmatprep.subr.mxu0 0.0
        %998 = vmatpush1.msra.mxu0 0.0
        %999 = vmatprep.mubr.f32.mxu0 0.0
        %1000 = vmatmul.mubr.f32.gmra.mrb[0].mxu0 %v911
        %v1001 = vpop.f32.mrb[0].mxu0
        %v1002 = vadd.f32 0.0, %v1001
        %v1003 = vpop.f32.mrb[0].mxu0
        %1004 = vmatprep.mubr.f32.mxu0 0.0
        %1005 = vmatmul.mubr.f32.gmra.mrb[0].mxu0 %v913
        %v1006 = vpop.f32.mrb[0].mxu0
        %v1007 = vadd.f32 0.0, %v1006
        %v1008 = vpop.f32.mrb[0].mxu0
        %1009 = vmatprep.mubr.f32.mxu0 0.0
        %1010 = vmatmul.mubr.f32.gmra.mrb[0].mxu0 %v915
        %v1011 = vpop.f32.mrb[0].mxu0
        %v1012 = vadd.f32 0.0, %v1011
        %v1013 = vpop.f32.mrb[0].mxu0
        %1014 = vmatprep.mubr.f32.mxu0 0.0
        %1015 = vmatmul.mubr.f32.gmra.mrb[0].mxu0 %v917
        %v1016 = vpop.f32.mrb[0].mxu0
        %v1017 = vadd.f32 0.0, %v1016
        %v1018 = vpop.f32.mrb[0].mxu0
        %1019 = vmatprep.mubr.f32.mxu0 0.0
        %1020 = vmatmul.mubr.f32.gmra.mrb[0].mxu0 %v919
        %v1021 = vpop.f32.mrb[0].mxu0
        %v1022 = vadd.f32 0.0, %v1021
        %v1023 = vpop.f32.mrb[0].mxu0
        %1024 = vmatprep.mubr.f32.mxu0 0.0
        %1025 = vmatmul.mubr.f32.gmra.mrb[0].mxu0 %v921
        %v1026 = vpop.f32.mrb[0].mxu0
        %v1027 = vadd.f32 0.0, %v1026
        %v1028 = vpop.f32.mrb[0].mxu0
        %1029 = vmatprep.mubr.f32.mxu0 0.0
        %1030 = vmatmul.mubr.f32.gmra.mrb[0].mxu0 %v923
        %v1031 = vpop.f32.mrb[0].mxu0
        %v1032 = vadd.f32 0.0, %v1031
        %v1033 = vpop.f32.mrb[0].mxu0
        %1034 = vmatprep.mubr.f32.mxu0 0.0
        %1035 = vmatmul.mubr.f32.gmra.mrb[0].mxu0 %v925
        %v1036 = vpop.f32.mrb[0].mxu0
        %v1037 = vadd.f32 0.0, %v1036
        %v1038 = vpop.f32.mrb[0].mxu0
        %1039 = vmatprep.mubr.f32.mxu0 0.0
        %1040 = vmatmul.mubr.f32.gmra.mrb[0].mxu0 %v927
        %v1041 = vpop.f32.mrb[0].mxu0
        %v1042 = vadd.f32 0.0, %v1041
        %v1043 = vpop.f32.mrb[0].mxu0
        %1044 = vmatprep.mubr.f32.mxu0 0.0
        %1045 = vmatmul.mubr.f32.gmra.mrb[0].mxu0 %v929
        %v1046 = vpop.f32.mrb[0].mxu0
        %v1047 = vadd.f32 0.0, %v1046
        %v1048 = vpop.f32.mrb[0].mxu0
        %1049 = vmatprep.mubr.f32.mxu0 0.0
        %1050 = vmatmul.mubr.f32.gmra.mrb[0].mxu0 %v931
        %v1051 = vpop.f32.mrb[0].mxu0
        %v1052 = vpop.f32.mrb[0].mxu0
        %1053 = vmatprep.mubr.f32.mxu0 0.0
        %1054 = vmatmul.mubr.f32.gmra.mrb[0].mxu0 %v933
        %v1055 = vpop.f32.mrb[0].mxu0
        %v1056 = vpop.f32.mrb[0].mxu0
        %1057 = vdwg.mxu0
        %v1058 = vmul.f32 %v1002, %v1002
        %v1059 = vmul.f32 %v1007, %v1007
        %v1060 = vmul.f32 %v1012, %v1012
        %v1061 = vmul.f32 %v1017, %v1017
        %v1062 = vmul.f32 %v1002, %v1012
        %v1063 = vmul.f32 %v1007, %v1017
        %v1064 = vsub.f32 %v1022, %v1058
        %v1065 = vsub.f32 %v1027, %v1059
        %v1066 = vsub.f32 %v1032, %v1060
        %v1067 = vsub.f32 %v1037, %v1061
        %v1068 = vsub.f32 %v1042, %v1062
        %v1069 = vsub.f32 %v1047, %v1063
        %v1070 = vmul.f32 %v1068, 2.0
        %v1071 = vmul.f32 %v1069, 2.0
        %v1072 = vadd.f32 %v1070, 0.0009
        %v1073 = vadd.f32 %v1071, 0.0009
        %v1074 = vadd.f32 %v1064, %v1066
        %v1075 = vadd.f32 %v1065, %v1067
        %v1076 = vadd.f32 %v1074, 0.0009
        %v1077 = vadd.f32 %v1075, 0.0009
        %v1078 = vrcp.pop %v1076
        %v1079 = vrcp.pop %v1077
        %v1080 = vmul.f32 %v1072, %v1078
        %v1081 = vmul.f32 %v1073, %v1079
        %v1082 = vmul.f32 %v1080, %v1080
        %v1083 = vmul.f32 %v1081, %v1081
        %v1084 = vmul.f32 %v1082, %v1080
        %v1085 = vmul.f32 %v1083, %v1081
        %v1086 = vmul.f32 %v884, %v1084
        %v1087 = vmul.f32 %v885, %v1085
        %1090 = vrot.lane.b32.xlu0 %v467, 112
        %v1091 = vpop.permute.xlu0 %1090
        %1092 = vrot.lane.b32.xlu0 %v472, 112
        %v1093 = vpop.permute.xlu0 %1092
        %1094 = vrot.lane.b32.xlu0 %v467, 96
        %v1095 = vpop.permute.xlu0 %1094
        %1096 = vrot.lane.b32.xlu0 %v472, 96
        %v1097 = vpop.permute.xlu0 %1096
        %1098 = vrot.lane.b32.xlu0 %v467, 80
        %v1099 = vpop.permute.xlu0 %1098
        %1100 = vrot.lane.b32.xlu0 %v472, 80
        %v1101 = vpop.permute.xlu0 %1100
        %1102 = vrot.lane.b32.xlu0 %v467, 64
        %v1103 = vpop.permute.xlu0 %1102
        %1104 = vrot.lane.b32.xlu0 %v472, 64
        %v1105 = vpop.permute.xlu0 %1104
        %1106 = vrot.lane.b32.xlu0 %v467, 48
        %v1107 = vpop.permute.xlu0 %1106
        %1108 = vrot.lane.b32.xlu0 %v472, 48
        %v1109 = vpop.permute.xlu0 %1108
        %s1110 = scalar_lea.vmem %s3, 48
        %v1111 = vld [vmem:[%s1110] sm:$0xff]
        %v1112 = vld [vmem:[%s1110 + $0x8] sm:$0xff]
        %v1113 = vsel %vm260, %v467, 0
        %v1115 = vsel %vm260, %v472, 0
        %v1117 = vsel %vm260, %v1091, 0
        %v1119 = vsel %vm260, %v1093, 0
        %v1121 = vsel %vm260, %v1095, 0
        %v1123 = vsel %vm260, %v1097, 0
        %v1125 = vsel %vm260, %v1099, 0
        %v1127 = vsel %vm260, %v1101, 0
        %v1129 = vsel %vm260, %v1103, 0
        %v1131 = vsel %vm260, %v1105, 0
        %v1133 = vsel %vm260, %v1107, 0
        %v1135 = vsel %vm260, %v1109, 0
        %1137 = vmatprep.subr.mxu0 0.0
        %1138 = vmatpush1.msra.mxu0 %v1111
        %1139 = vmatprep.subr.mxu0 0.0
        %1140 = vmatpush1.msra.mxu0 %v1112
        %1141 = vmatprep.subr.mxu0 0.0
        %1142 = vmatpush1.msra.mxu0 0.0
        %1143 = vmatprep.subr.mxu0 0.0
        %1144 = vmatpush1.msra.mxu0 0.0
        %1145 = vmatprep.subr.mxu0 0.0
        %1146 = vmatpush1.msra.mxu0 0.0
        %1147 = vmatprep.subr.mxu0 0.0
        %1148 = vmatpush1.msra.mxu0 0.0
        %1149 = vmatprep.subr.mxu0 0.0
        %1150 = vmatpush1.msra.mxu0 0.0
        %1151 = vmatprep.subr.mxu0 0.0
        %1152 = vmatpush1.msra.mxu0 0.0
        %1153 = vmatprep.subr.mxu0 0.0
        %1154 = vmatpush1.msra.mxu0 0.0
        %1155 = vmatprep.subr.mxu0 0.0
        %1156 = vmatpush1.msra.mxu0 0.0
        %1157 = vmatprep.subr.mxu0 0.0
        %1158 = vmatpush1.msra.mxu0 0.0
        %1159 = vmatprep.subr.mxu0 0.0
        %1160 = vmatpush1.msra.mxu0 0.0
        %1161 = vmatprep.subr.mxu0 0.0
        %1162 = vmatpush1.msra.mxu0 0.0
        %1163 = vmatprep.subr.mxu0 0.0
        %1164 = vmatpush1.msra.mxu0 0.0
        %1165 = vmatprep.subr.mxu0 0.0
        %1166 = vmatpush1.msra.mxu0 0.0
        %1167 = vmatprep.subr.mxu0 0.0
        %1168 = vmatpush1.msra.mxu0 0.0
        %1169 = vmatprep.subr.mxu0 0.0
        %1170 = vmatpush1.msra.mxu0 0.0
        %1171 = vmatprep.subr.mxu0 0.0
        %1172 = vmatpush1.msra.mxu0 0.0
        %1173 = vmatprep.subr.mxu0 0.0
        %1174 = vmatpush1.msra.mxu0 0.0
        %1175 = vmatprep.subr.mxu0 0.0
        %1176 = vmatpush1.msra.mxu0 0.0
        %1177 = vmatprep.subr.mxu0 0.0
        %1178 = vmatpush1.msra.mxu0 0.0
        %1179 = vmatprep.subr.mxu0 0.0
        %1180 = vmatpush1.msra.mxu0 0.0
        %1181 = vmatprep.subr.mxu0 0.0
        %1182 = vmatpush1.msra.mxu0 0.0
        %1183 = vmatprep.subr.mxu0 0.0
        %1184 = vmatpush1.msra.mxu0 0.0
        %1185 = vmatprep.subr.mxu0 0.0
        %1186 = vmatpush1.msra.mxu0 0.0
        %1187 = vmatprep.subr.mxu0 0.0
        %1188 = vmatpush1.msra.mxu0 0.0
        %1189 = vmatprep.subr.mxu0 0.0
        %1190 = vmatpush1.msra.mxu0 0.0
        %1191 = vmatprep.subr.mxu0 0.0
        %1192 = vmatpush1.msra.mxu0 0.0
        %1193 = vmatprep.subr.mxu0 0.0
        %1194 = vmatpush1.msra.mxu0 0.0
        %1195 = vmatprep.subr.mxu0 0.0
        %1196 = vmatpush1.msra.mxu0 0.0
        %1197 = vmatprep.subr.mxu0 0.0
        %1198 = vmatpush1.msra.mxu0 0.0
        %1199 = vmatprep.subr.mxu0 0.0
        %1200 = vmatpush1.msra.mxu0 0.0
        %1201 = vmatprep.mubr.f32.mxu0 0.0
        %1202 = vmatmul.mubr.f32.gmra.mrb[0].mxu0 %v1113
        %v1203 = vpop.f32.mrb[0].mxu0
        %v1204 = vadd.f32 0.0, %v1203
        %v1205 = vpop.f32.mrb[0].mxu0
        %1206 = vmatprep.mubr.f32.mxu0 0.0
        %1207 = vmatmul.mubr.f32.gmra.mrb[0].mxu0 %v1115
        %v1208 = vpop.f32.mrb[0].mxu0
        %v1209 = vadd.f32 0.0, %v1208
        %v1210 = vpop.f32.mrb[0].mxu0
        %1211 = vmatprep.mubr.f32.mxu0 0.0
        %1212 = vmatmul.mubr.f32.gmra.mrb[0].mxu0 %v1117
        %v1213 = vpop.f32.mrb[0].mxu0
        %v1214 = vadd.f32 0.0, %v1213
        %v1215 = vpop.f32.mrb[0].mxu0
        %1216 = vmatprep.mubr.f32.mxu0 0.0
        %1217 = vmatmul.mubr.f32.gmra.mrb[0].mxu0 %v1119
        %v1218 = vpop.f32.mrb[0].mxu0
        %v1219 = vadd.f32 0.0, %v1218
        %v1220 = vpop.f32.mrb[0].mxu0
        %1221 = vmatprep.mubr.f32.mxu0 0.0
        %1222 = vmatmul.mubr.f32.gmra.mrb[0].mxu0 %v1121
        %v1223 = vpop.f32.mrb[0].mxu0
        %v1224 = vadd.f32 0.0, %v1223
        %v1225 = vpop.f32.mrb[0].mxu0
        %1226 = vmatprep.mubr.f32.mxu0 0.0
        %1227 = vmatmul.mubr.f32.gmra.mrb[0].mxu0 %v1123
        %v1228 = vpop.f32.mrb[0].mxu0
        %v1229 = vadd.f32 0.0, %v1228
        %v1230 = vpop.f32.mrb[0].mxu0
        %1231 = vmatprep.mubr.f32.mxu0 0.0
        %1232 = vmatmul.mubr.f32.gmra.mrb[0].mxu0 %v1125
        %v1233 = vpop.f32.mrb[0].mxu0
        %v1234 = vadd.f32 0.0, %v1233
        %v1235 = vpop.f32.mrb[0].mxu0
        %1236 = vmatprep.mubr.f32.mxu0 0.0
        %1237 = vmatmul.mubr.f32.gmra.mrb[0].mxu0 %v1127
        %v1238 = vpop.f32.mrb[0].mxu0
        %v1239 = vadd.f32 0.0, %v1238
        %v1240 = vpop.f32.mrb[0].mxu0
        %1241 = vmatprep.mubr.f32.mxu0 0.0
        %1242 = vmatmul.mubr.f32.gmra.mrb[0].mxu0 %v1129
        %v1243 = vpop.f32.mrb[0].mxu0
        %v1244 = vadd.f32 0.0, %v1243
        %v1245 = vpop.f32.mrb[0].mxu0
        %1246 = vmatprep.mubr.f32.mxu0 0.0
        %1247 = vmatmul.mubr.f32.gmra.mrb[0].mxu0 %v1131
        %v1248 = vpop.f32.mrb[0].mxu0
        %v1249 = vadd.f32 0.0, %v1248
        %v1250 = vpop.f32.mrb[0].mxu0
        %1251 = vmatprep.mubr.f32.mxu0 0.0
        %1252 = vmatmul.mubr.f32.gmra.mrb[0].mxu0 %v1133
        %v1253 = vpop.f32.mrb[0].mxu0
        %v1254 = vpop.f32.mrb[0].mxu0
        %1255 = vmatprep.mubr.f32.mxu0 0.0
        %1256 = vmatmul.mubr.f32.gmra.mrb[0].mxu0 %v1135
        %v1257 = vpop.f32.mrb[0].mxu0
        %v1258 = vpop.f32.mrb[0].mxu0
        %1259 = vdwg.mxu0
        %v1260 = vmul.f32 %v1204, %v1204
        %v1261 = vmul.f32 %v1209, %v1209
        %v1262 = vmul.f32 %v1214, %v1214
        %v1263 = vmul.f32 %v1219, %v1219
        %v1264 = vmul.f32 %v1204, %v1214
        %v1265 = vmul.f32 %v1209, %v1219
        %v1266 = vsub.f32 %v1224, %v1260
        %v1267 = vsub.f32 %v1229, %v1261
        %v1268 = vsub.f32 %v1234, %v1262
        %v1269 = vsub.f32 %v1239, %v1263
        %v1270 = vsub.f32 %v1244, %v1264
        %v1271 = vsub.f32 %v1249, %v1265
        %v1272 = vmul.f32 %v1270, 2.0
        %v1273 = vmul.f32 %v1271, 2.0
        %v1274 = vadd.f32 %v1272, 0.0009
        %v1275 = vadd.f32 %v1273, 0.0009
        %v1276 = vadd.f32 %v1266, %v1268
        %v1277 = vadd.f32 %v1267, %v1269
        %v1278 = vadd.f32 %v1276, 0.0009
        %v1279 = vadd.f32 %v1277, 0.0009
        %v1280 = vrcp.pop %v1278
        %v1281 = vrcp.pop %v1279
        %v1282 = vmul.f32 %v1274, %v1280
        %v1283 = vmul.f32 %v1275, %v1281
        %v1284 = vmul.f32 %v1282, %v1282
        %v1285 = vmul.f32 %v1283, %v1283
        %v1286 = vmul.f32 %v1284, %v1282
        %v1287 = vmul.f32 %v1285, %v1283
        %v1288 = vmul.f32 %v1086, %v1286
        %v1289 = vmul.f32 %v1087, %v1287
        %1292 = vrot.lane.b32.xlu0 %v477, 112
        %v1293 = vpop.permute.xlu0 %1292
        %1294 = vrot.lane.b32.xlu0 %v482, 112
        %v1295 = vpop.permute.xlu0 %1294
        %1296 = vrot.lane.b32.xlu0 %v477, 96
        %v1297 = vpop.permute.xlu0 %1296
        %1298 = vrot.lane.b32.xlu0 %v482, 96
        %v1299 = vpop.permute.xlu0 %1298
        %1300 = vrot.lane.b32.xlu0 %v477, 80
        %v1301 = vpop.permute.xlu0 %1300
        %1302 = vrot.lane.b32.xlu0 %v482, 80
        %v1303 = vpop.permute.xlu0 %1302
        %1304 = vrot.lane.b32.xlu0 %v477, 64
        %v1305 = vpop.permute.xlu0 %1304
        %1306 = vrot.lane.b32.xlu0 %v482, 64
        %v1307 = vpop.permute.xlu0 %1306
        %1308 = vrot.lane.b32.xlu0 %v477, 48
        %v1309 = vpop.permute.xlu0 %1308
        %1310 = vrot.lane.b32.xlu0 %v482, 48
        %v1311 = vpop.permute.xlu0 %1310
        %s1312 = scalar_lea.vmem %s3, 64
        %v1313 = vld [vmem:[%s1312] sm:$0xff]
        %v1314 = vld [vmem:[%s1312 + $0x8] sm:$0xff]
        %v1315 = vsel %vm260, %v477, 0
        %v1317 = vsel %vm260, %v482, 0
        %v1319 = vsel %vm260, %v1293, 0
        %v1321 = vsel %vm260, %v1295, 0
        %v1323 = vsel %vm260, %v1297, 0
        %v1325 = vsel %vm260, %v1299, 0
        %v1327 = vsel %vm260, %v1301, 0
        %v1329 = vsel %vm260, %v1303, 0
        %v1331 = vsel %vm260, %v1305, 0
        %v1333 = vsel %vm260, %v1307, 0
        %v1335 = vsel %vm260, %v1309, 0
        %v1337 = vsel %vm260, %v1311, 0
        %1339 = vmatprep.subr.mxu0 0.0
        %1340 = vmatpush1.msra.mxu0 %v1313
        %1341 = vmatprep.subr.mxu0 0.0
        %1342 = vmatpush1.msra.mxu0 %v1314
        %1343 = vmatprep.subr.mxu0 0.0
        %1344 = vmatpush1.msra.mxu0 0.0
        %1345 = vmatprep.subr.mxu0 0.0
        %1346 = vmatpush1.msra.mxu0 0.0
        %1347 = vmatprep.subr.mxu0 0.0
        %1348 = vmatpush1.msra.mxu0 0.0
        %1349 = vmatprep.subr.mxu0 0.0
        %1350 = vmatpush1.msra.mxu0 0.0
        %1351 = vmatprep.subr.mxu0 0.0
        %1352 = vmatpush1.msra.mxu0 0.0
        %1353 = vmatprep.subr.mxu0 0.0
        %1354 = vmatpush1.msra.mxu0 0.0
        %1355 = vmatprep.subr.mxu0 0.0
        %1356 = vmatpush1.msra.mxu0 0.0
        %1357 = vmatprep.subr.mxu0 0.0
        %1358 = vmatpush1.msra.mxu0 0.0
        %1359 = vmatprep.subr.mxu0 0.0
        %1360 = vmatpush1.msra.mxu0 0.0
        %1361 = vmatprep.subr.mxu0 0.0
        %1362 = vmatpush1.msra.mxu0 0.0
        %1363 = vmatprep.subr.mxu0 0.0
        %1364 = vmatpush1.msra.mxu0 0.0
        %1365 = vmatprep.subr.mxu0 0.0
        %1366 = vmatpush1.msra.mxu0 0.0
        %1367 = vmatprep.subr.mxu0 0.0
        %1368 = vmatpush1.msra.mxu0 0.0
        %1369 = vmatprep.subr.mxu0 0.0
        %1370 = vmatpush1.msra.mxu0 0.0
        %1371 = vmatprep.subr.mxu0 0.0
        %1372 = vmatpush1.msra.mxu0 0.0
        %1373 = vmatprep.subr.mxu0 0.0
        %1374 = vmatpush1.msra.mxu0 0.0
        %1375 = vmatprep.subr.mxu0 0.0
        %1376 = vmatpush1.msra.mxu0 0.0
        %1377 = vmatprep.subr.mxu0 0.0
        %1378 = vmatpush1.msra.mxu0 0.0
        %1379 = vmatprep.subr.mxu0 0.0
        %1380 = vmatpush1.msra.mxu0 0.0
        %1381 = vmatprep.subr.mxu0 0.0
        %1382 = vmatpush1.msra.mxu0 0.0
        %1383 = vmatprep.subr.mxu0 0.0
        %1384 = vmatpush1.msra.mxu0 0.0
        %1385 = vmatprep.subr.mxu0 0.0
        %1386 = vmatpush1.msra.mxu0 0.0
        %1387 = vmatprep.subr.mxu0 0.0
        %1388 = vmatpush1.msra.mxu0 0.0
        %1389 = vmatprep.subr.mxu0 0.0
        %1390 = vmatpush1.msra.mxu0 0.0
        %1391 = vmatprep.subr.mxu0 0.0
        %1392 = vmatpush1.msra.mxu0 0.0
        %1393 = vmatprep.subr.mxu0 0.0
        %1394 = vmatpush1.msra.mxu0 0.0
        %1395 = vmatprep.subr.mxu0 0.0
        %1396 = vmatpush1.msra.mxu0 0.0
        %1397 = vmatprep.subr.mxu0 0.0
        %1398 = vmatpush1.msra.mxu0 0.0
        %1399 = vmatprep.subr.mxu0 0.0
        %1400 = vmatpush1.msra.mxu0 0.0
        %1401 = vmatprep.subr.mxu0 0.0
        %1402 = vmatpush1.msra.mxu0 0.0
        %1403 = vmatprep.mubr.f32.mxu0 0.0
        %1404 = vmatmul.mubr.f32.gmra.mrb[0].mxu0 %v1315
        %v1405 = vpop.f32.mrb[0].mxu0
        %v1406 = vadd.f32 0.0, %v1405
        %v1407 = vpop.f32.mrb[0].mxu0
        %1408 = vmatprep.mubr.f32.mxu0 0.0
        %1409 = vmatmul.mubr.f32.gmra.mrb[0].mxu0 %v1317
        %v1410 = vpop.f32.mrb[0].mxu0
        %v1411 = vadd.f32 0.0, %v1410
        %v1412 = vpop.f32.mrb[0].mxu0
        %1413 = vmatprep.mubr.f32.mxu0 0.0
        %1414 = vmatmul.mubr.f32.gmra.mrb[0].mxu0 %v1319
        %v1415 = vpop.f32.mrb[0].mxu0
        %v1416 = vadd.f32 0.0, %v1415
        %v1417 = vpop.f32.mrb[0].mxu0
        %1418 = vmatprep.mubr.f32.mxu0 0.0
        %1419 = vmatmul.mubr.f32.gmra.mrb[0].mxu0 %v1321
        %v1420 = vpop.f32.mrb[0].mxu0
        %v1421 = vadd.f32 0.0, %v1420
        %v1422 = vpop.f32.mrb[0].mxu0
        %1423 = vmatprep.mubr.f32.mxu0 0.0
        %1424 = vmatmul.mubr.f32.gmra.mrb[0].mxu0 %v1323
        %v1425 = vpop.f32.mrb[0].mxu0
        %v1426 = vadd.f32 0.0, %v1425
        %v1427 = vpop.f32.mrb[0].mxu0
        %1428 = vmatprep.mubr.f32.mxu0 0.0
        %1429 = vmatmul.mubr.f32.gmra.mrb[0].mxu0 %v1325
        %v1430 = vpop.f32.mrb[0].mxu0
        %v1431 = vadd.f32 0.0, %v1430
        %v1432 = vpop.f32.mrb[0].mxu0
        %1433 = vmatprep.mubr.f32.mxu0 0.0
        %1434 = vmatmul.mubr.f32.gmra.mrb[0].mxu0 %v1327
        %v1435 = vpop.f32.mrb[0].mxu0
        %v1436 = vadd.f32 0.0, %v1435
        %v1437 = vpop.f32.mrb[0].mxu0
        %1438 = vmatprep.mubr.f32.mxu0 0.0
        %1439 = vmatmul.mubr.f32.gmra.mrb[0].mxu0 %v1329
        %v1440 = vpop.f32.mrb[0].mxu0
        %v1441 = vadd.f32 0.0, %v1440
        %v1442 = vpop.f32.mrb[0].mxu0
        %1443 = vmatprep.mubr.f32.mxu0 0.0
        %1444 = vmatmul.mubr.f32.gmra.mrb[0].mxu0 %v1331
        %v1445 = vpop.f32.mrb[0].mxu0
        %v1446 = vadd.f32 0.0, %v1445
        %v1447 = vpop.f32.mrb[0].mxu0
        %1448 = vmatprep.mubr.f32.mxu0 0.0
        %1449 = vmatmul.mubr.f32.gmra.mrb[0].mxu0 %v1333
        %v1450 = vpop.f32.mrb[0].mxu0
        %v1451 = vadd.f32 0.0, %v1450
        %v1452 = vpop.f32.mrb[0].mxu0
        %1453 = vmatprep.mubr.f32.mxu0 0.0
        %1454 = vmatmul.mubr.f32.gmra.mrb[0].mxu0 %v1335
        %v1455 = vpop.f32.mrb[0].mxu0
        %v1456 = vadd.f32 0.0, %v1455
        %v1457 = vpop.f32.mrb[0].mxu0
        %1458 = vmatprep.mubr.f32.mxu0 0.0
        %1459 = vmatmul.mubr.f32.gmra.mrb[0].mxu0 %v1337
        %v1460 = vpop.f32.mrb[0].mxu0
        %v1461 = vadd.f32 0.0, %v1460
        %v1462 = vpop.f32.mrb[0].mxu0
        %1463 = vdwg.mxu0
        %v1464 = vmul.f32 %v1406, %v1406
        %v1465 = vmul.f32 %v1411, %v1411
        %v1466 = vmul.f32 %v1416, %v1416
        %v1467 = vmul.f32 %v1421, %v1421
        %v1468 = vmul.f32 %v1406, %v1416
        %v1469 = vmul.f32 %v1411, %v1421
        %v1470 = vsub.f32 %v1426, %v1464
        %v1471 = vsub.f32 %v1431, %v1465
        %v1472 = vsub.f32 %v1436, %v1466
        %v1473 = vsub.f32 %v1441, %v1467
        %v1474 = vsub.f32 %v1446, %v1468
        %v1475 = vsub.f32 %v1451, %v1469
        %v1476 = vmul.f32 %v1468, 2.0
        %v1477 = vmul.f32 %v1469, 2.0
        %v1478 = vadd.f32 %v1476, 0.0001
        %v1479 = vadd.f32 %v1477, 0.0001
        %v1480 = vadd.f32 %v1464, %v1466
        %v1481 = vadd.f32 %v1465, %v1467
        %v1482 = vadd.f32 %v1480, 0.0001
        %v1483 = vadd.f32 %v1481, 0.0001
        %v1484 = vrcp.pop %v1482
        %v1485 = vrcp.pop %v1483
        %v1486 = vmul.f32 %v1478, %v1484
        %v1487 = vmul.f32 %v1479, %v1485
        %v1488 = vmul.f32 %v1474, 2.0
        %v1489 = vmul.f32 %v1475, 2.0
        %v1490 = vadd.f32 %v1488, 0.0009
        %v1491 = vadd.f32 %v1489, 0.0009
        %v1492 = vadd.f32 %v1470, %v1472
        %v1493 = vadd.f32 %v1471, %v1473
        %v1494 = vadd.f32 %v1492, 0.0009
        %v1495 = vadd.f32 %v1493, 0.0009
        %v1496 = vrcp.pop %v1494
        %v1497 = vrcp.pop %v1495
        %v1498 = vmul.f32 %v1490, %v1496
        %v1499 = vmul.f32 %v1491, %v1497
        %v1500 = vmul.f32 %v1498, %v1498
        %v1501 = vmul.f32 %v1499, %v1499
        %v1502 = vmul.f32 %v1500, %v1498
        %v1503 = vmul.f32 %v1501, %v1499
        %v1504 = vmul.f32 %v1288, %v1502
        %v1505 = vmul.f32 %v1289, %v1503
        %v1506 = vmul.f32 %v1486, %v1486
        %v1507 = vmul.f32 %v1487, %v1487
        %v1508 = vmul.f32 %v1506, %v1486
        %v1509 = vmul.f32 %v1507, %v1487
        %v1510 = vmul.f32 %v1508, %v1504
        %v1511 = vmul.f32 %v1509, %v1505
        %v1512 = vsel %vm260, %v1510, 0.0
        %v1513 = vsel %vm260, %v1511, 0.0
        %v1514 = vadd.f32 %v1512, %v1513
        %1515 = vadd.xlane.f32.xlu0 %v1514
        %v1516 = vpop.xlane.xlu0 %1515
        %v1517 = vrot.slane %v1516, 4
        %v1518 = vadd.f32 %v1516, %v1517
        %v1519 = vrot.slane %v1518, 2
        %v1520 = vadd.f32 %v1518, %v1519
        %v1521 = vrot.slane %v1520, 1
        %v1522 = vadd.f32 %v1520, %v1521
        %s1523 = vtos %v1522
        %s1524 = ssub.f32 256.0, %s1523
        %s1525 = smul.f32 %s1524, 5.0
        %v1526 = vsel %vm260, %v1456, 0.0
        %v1527 = vsel %vm260, %v1461, 0.0
        %v1528 = vadd.f32 %v1526, %v1527
        %1529 = vadd.xlane.f32.xlu0 %v1528
        %v1530 = vpop.xlane.xlu0 %1529
        %v1531 = vrot.slane %v1530, 4
        %v1532 = vadd.f32 %v1530, %v1531
        %v1533 = vrot.slane %v1532, 2
        %v1534 = vadd.f32 %v1532, %v1533
        %v1535 = vrot.slane %v1534, 1
        %v1536 = vadd.f32 %v1534, %v1535
        %s1537 = vtos %v1536
        %s1538 = smul.f32 %s1537, 195.0
        %s1539 = sadd.f32 %s1525, %s1538
        %v1540 = vstv %s1539
        %1541 = vst [vmem:[%s255] sm:$0xff] %v1540
        %s1542 = sand.u32 %s126, 1
        %s1543 = scalar_lea.sflag [#allocation5], %s1542
        %s1544 = sand.u32 %s126, 1
        %s1545 = smul.addr %s1544, 8
        %s1546 = scalar_lea.vmem [#allocation8], %s1545
        // Predicated region
        $region45: #{tpu_custom_call.1} parent=35 // pred_check
          %p1547 = pneg %p136
        $region46: #{tpu_custom_call.1} parent=35 // pred_check_branch
          %1549 = sbr.rel (%p1547) target = $region48
        $region47: #{tpu_custom_call.1} parent=35 // pred_region
          %s1551 = ssub.s32 128, 128
          %1552 = vsyncadd %s1543, %s1551
          %s1553 = smul.addr %s24, 128
          %s1554 = scalar_lea.hbm %s4, %s1553
          %s1556 = sshll.u32 %s1546, 4
          %s1557 = int_to_ptr.vmem [resolvable:$true] %s1556
          %1559 = dma.vmem_to_hbm [thread:$0]  %s1557, 128, %s1554, %s1543
        $region48: #{tpu_custom_call.1} parent=35 // pred_fallthru
          _
      $region36: #{tpu_custom_call.1} parent=5 // pred_fallthru
        _
      %p1560 = scmp.le.s32.totalorder 2, %s19
      // Predicated region
      $region49: #{tpu_custom_call.1} parent=5 // pred_check
        %p1561 = pneg %p1560
      $region50: #{tpu_custom_call.1} parent=5 // pred_check_branch
        %1563 = sbr.rel (%p1561) target = $region52
      $region51: #{tpu_custom_call.1} parent=5 // pred_region
        %s1564 = ssub.s32 %s19, 2
        // Predicated region
        $region53: #{tpu_custom_call.1} parent=51 // pred_check
          %p1565 = pneg %p142
        $region54: #{tpu_custom_call.1} parent=51 // pred_check_branch
          %1567 = sbr.rel (%p1565) target = $region56
        $region55: #{tpu_custom_call.1} parent=51 // pred_region
          %s1568 = sand.u32 %s127, 1
          %s1569 = scalar_lea.sflag [#allocation5], %s1568
          %s1570 = sand.u32 %s127, 1
          %s1571 = smul.addr %s1570, 8
          %s1572 = scalar_lea.vmem [#allocation8], %s1571
          %1573 = dma.done %s1569, 128
        $region56: #{tpu_custom_call.1} parent=51 // pred_fallthru
          _
      $region52: #{tpu_custom_call.1} parent=5 // pred_fallthru
        _
    $region6: #{tpu_custom_call.1} parent=1 // loop_footer
      %s23 = sadd.s32 1, %s19
    $region7: #{tpu_custom_call.1} parent=1 // loop_footer_branch
      %18 = sbr.rel target = $region3
    $region8: #{tpu_custom_call.1} parent=1 // loop_exit
      _
    %1574 = vsyncpa [#allocation4], 1
    %s1575 = scalar_lea.sflag [#allocation4], 1
    %1576 = vsyncpa %s1575, 1
    %1577 = vsyncpa [#allocation7], 1
    %s1578 = scalar_lea.sflag [#allocation7], 1
    %1579 = vsyncpa %s1578, 1
    %1580 = vsyncpa [#allocation5], 1
    %s1581 = scalar_lea.sflag [#allocation5], 1
    %1582 = vsyncpa %s1581, 1

</llo_original>
